<compile_context>
chip_gen: v7x
topology: tpu7x:2x2x1
jax: 0.10.0
libtpu: 0.0.40
codegen_flags: <defaults>
</compile_context>

<pallas_src>
import functools
import math

import jax
import jax.numpy as jnp
from jax.experimental import pallas as pl
from jax.experimental.pallas import tpu as pltpu

BN_EPS = 1e-5
_LANE = 128


def _pad_to(n, m):
    return ((n + m - 1) // m) * m


def _relu6(x):
    return jnp.minimum(jnp.maximum(x, 0.0), 6.0)


# ---------------------------- hardware-aware knobs ----------------------------

_VMEM_BUDGET = None
_WIDE_MXU = None


def _vmem_budget_bytes():
    """Generation-aware scoped-VMEM budget (85% of physical, 8 MiB headroom)."""
    global _VMEM_BUDGET
    if _VMEM_BUDGET is None:
        cap = 64 * 1024 * 1024  # conservative default (v7x-sized)
        try:
            info = pltpu.get_tpu_info()
            for attr in ("vmem_capacity_bytes", "vmem_bytes", "vmem_size_bytes"):
                v = getattr(info, attr, None)
                if v:
                    cap = int(v)
                    break
        except Exception:
            pass
        _VMEM_BUDGET = max(32 * 1024 * 1024,
                           min(int(cap * 0.85), cap - 8 * 1024 * 1024))
    return _VMEM_BUDGET


def _prefers_256_lanes():
    """v6e/v7x have 2x256^2 MXUs -> 256-wide N tiles; v5e/v4 keep 128."""
    global _WIDE_MXU
    if _WIDE_MXU is None:
        wide = True
        try:
            kind = jax.devices()[0].device_kind.lower()
            if "v5 lite" in kind or "v5e" in kind or "v4" in kind or "v3" in kind:
                wide = False
        except Exception:
            pass
        _WIDE_MXU = wide
    return _WIDE_MXU


def _cparams(semantics):
    return pltpu.CompilerParams(dimension_semantics=semantics,
                                vmem_limit_bytes=_vmem_budget_bytes())


# ---------------------------- fused matmul kernel ----------------------------

def _matmul_bn_kernel(x_ref, w_ref, s_ref, b_ref, *rest, apply_relu6, has_res):
    # y = relu6?((x @ w) * scale + bias [+ residual]); bf16 MXU, f32 epilogue.
    if has_res:
        r_ref, o_ref = rest
    else:
        (o_ref,) = rest
    y = jnp.dot(x_ref[...], w_ref[...], preferred_element_type=jnp.float32)
    y = y * s_ref[...] + b_ref[...]
    if has_res:
        y = y + r_ref[...].astype(jnp.float32)
    if apply_relu6:
        y = _relu6(y)
    o_ref[...] = y.astype(o_ref.dtype)


def _pick_tn(N):
    if _prefers_256_lanes() and N % 256 == 0:
        return 256
    if N % 128 == 0:
        return 128
    return N


def _pick_tm(M, K, tn, out_itemsize, has_res):
    # Pick the largest tile that divides M and keeps the double-buffered
    # block footprint within ~60% of the generation's VMEM budget.
    budget = 0.6 * _vmem_budget_bytes()
    fixed = 2 * (K * tn * 2 + 2 * tn * 4)                      # w + scale/bias (x2 buf)
    per_row = 2 * (K * 2 + tn * out_itemsize + (tn * 2 if has_res else 0))
    divisors = [c for c in (2048, 1024, 512, 256, 128, 64, 32, 16, 8)
                if c <= M and M % c == 0]
    if not divisors:
        return M                                               # tiny M: full-dim block
    for c in divisors:
        if fixed + c * per_row <= budget:
            return c
    return divisors[-1]


def matmul_bn(x, w, scale, bias, *, relu6, residual=None, out_dtype=jnp.bfloat16):
    """Fused (x @ w) * scale + bias [+ residual] [ReLU6].  Used for 1x1 convs,
    the im2col'd stem conv and the classifier Linear.  Tiled over M and N."""
    M, K = x.shape
    K2, N = w.shape
    assert K == K2
    xs = x.astype(jnp.bfloat16)
    ws = w.astype(jnp.bfloat16)
    s = scale.reshape(1, N).astype(jnp.float32)
    b = bias.reshape(1, N).astype(jnp.float32)

    has_res = residual is not None
    tn = _pick_tn(N)
    tm = _pick_tm(M, K, tn, jnp.dtype(out_dtype).itemsize, has_res)
    grid = (M // tm, N // tn)

    args = [xs, ws, s, b]
    in_specs = [
        pl.BlockSpec((tm, K), lambda i, j: (i, 0)),
        pl.BlockSpec((K, tn), lambda i, j: (0, j)),
        pl.BlockSpec((1, tn), lambda i, j: (0, j)),
        pl.BlockSpec((1, tn), lambda i, j: (0, j)),
    ]
    if has_res:
        args.append(residual.astype(jnp.bfloat16))
        in_specs.append(pl.BlockSpec((tm, tn), lambda i, j: (i, j)))

    kernel = functools.partial(_matmul_bn_kernel, apply_relu6=relu6, has_res=has_res)
    return pl.pallas_call(
        kernel,
        grid=grid,
        out_shape=jax.ShapeDtypeStruct((M, N), out_dtype),
        in_specs=in_specs,
        out_specs=pl.BlockSpec((tm, tn), lambda i, j: (i, j)),
        compiler_params=_cparams(("parallel", "parallel")),
    )(*args)


# ---------------------------- depthwise conv kernels ----------------------------

def _dw_s1_kernel(x_ref, w_ref, s_ref, b_ref, o_ref, *, Ho, Wo):
    # x_ref: (1, Ho+2, Wo+2, tC) zero-padded bf16 input; w_ref: (9, tC) f32 taps.
    # Taps are sliced straight from the ref (no full f32 copy of the block):
    # only one column-shifted slab is live in f32 at a time.
    wk = w_ref[...]
    acc = jnp.zeros(o_ref.shape, jnp.float32)
    for dj in range(3):
        cols = x_ref[:, :, dj:dj + Wo, :].astype(jnp.float32)   # (1, Ho+2, Wo, tC)
        for di in range(3):                                     # row offsets are free
            k = di * 3 + dj
            acc = acc + cols[:, di:di + Ho, :, :] * wk[k:k + 1, :]
    y = acc * s_ref[...] + b_ref[...]
    o_ref[...] = _relu6(y).astype(o_ref.dtype)


def _dw_s2_kernel(xe_ref, xo_ref, w_ref, s_ref, b_ref, o_ref, *, Ho, Wo):
    # Direct stride-2 3x3 depthwise conv on column-phase-split inputs.
    # xe_ref / xo_ref: (1, 2*Ho+2, Wo+1, tC) = even / odd padded columns (bf16).
    wk = w_ref[...]
    tC = o_ref.shape[-1]
    acc = jnp.zeros(o_ref.shape, jnp.float32)
    for dj in range(3):
        if dj == 0:
            cols = xe_ref[:, :, 0:Wo, :]          # padded cols 2j
        elif dj == 1:
            cols = xo_ref[:, :, 0:Wo, :]          # padded cols 2j+1
        else:
            cols = xe_ref[:, :, 1:Wo + 1, :]      # padded cols 2j+2
        cols = cols.astype(jnp.float32)           # (1, 2*Ho+2, Wo, tC)
        lo = cols[:, 0:2 * Ho, :, :].reshape(1, Ho, 2, Wo, tC)
        hi = cols[:, 2:2 * Ho + 2, :, :].reshape(1, Ho, 2, Wo, tC)
        rows = (lo[:, :, 0, :, :],                # di = 0 -> padded rows 2i
                lo[:, :, 1, :, :],                # di = 1 -> padded rows 2i+1
                hi[:, :, 0, :, :])                # di = 2 -> padded rows 2i+2
        for di in range(3):
            k = di * 3 + dj
            acc = acc + rows[di] * wk[k:k + 1, :]
    y = acc * s_ref[...] + b_ref[...]
    o_ref[...] = _relu6(y).astype(o_ref.dtype)


def _pick_tc(C, in_elems_per_ch):
    # Wider channel tiles for the tiny-spatial late layers (fewer grid steps),
    # 128 for the large-spatial early layers (keeps the block small).
    if C % _LANE != 0:
        return C
    for cand in (512, 256):
        if C % cand == 0 and in_elems_per_ch * cand * 2 <= 4 * 1024 * 1024:
            return cand
    return _LANE


def depthwise_conv_bn_relu6(x, w9, scale, bias, stride):
    """3x3 depthwise conv (padding=1, stride 1 or 2) + folded BN + ReLU6.
    x: (B, H, W, C) activations (C a multiple of 128), w9: (9, C) f32 taps
    (kh*3+kw major).  Tiled over (batch, channel-tile), both axes 'parallel'."""
    B, H, W, C = x.shape
    x = x.astype(jnp.bfloat16)
    xpad = jnp.pad(x, ((0, 0), (1, 1), (1, 1), (0, 0)))
    s = scale.reshape(1, C).astype(jnp.float32)
    b = bias.reshape(1, C).astype(jnp.float32)
    w9 = w9.reshape(9, C).astype(jnp.float32)

    if stride == 1:
        Ho, Wo = H, W
        in_elems = (H + 2) * (W + 2)
    else:
        assert stride == 2 and H % 2 == 0 and W % 2 == 0
        Ho, Wo = H // 2, W // 2
        in_elems = 2 * (H + 2) * (Wo + 1)

    tC = _pick_tc(C, in_elems)
    grid = (B, C // tC)
    w_spec = pl.BlockSpec((9, tC), lambda bb, cc: (0, cc))
    sb_spec = pl.BlockSpec((1, tC), lambda bb, cc: (0, cc))

    if stride == 1:
        x_args = [xpad]
        in_blocks = [(1, H + 2, W + 2, tC)]
        kernel = functools.partial(_dw_s1_kernel, Ho=Ho, Wo=Wo)
    else:
        # TODO(synk): move the even/odd column-phase split inside the kernel
        # (strided pl.ds loads) to avoid these wrapper-side HBM copies.
        xe = xpad[:, :, 0::2, :]                  # (B, H+2, Wo+1, C) even padded cols
        xo = xpad[:, :, 1::2, :]                  # (B, H+2, Wo+1, C) odd padded cols
        x_args = [xe, xo]
        in_blocks = [(1, H + 2, Wo + 1, tC)] * 2
        kernel = functools.partial(_dw_s2_kernel, Ho=Ho, Wo=Wo)

    # TODO(synk): add a spatial row-tile grid axis with a 1-row halo (and fuse
    # expand->depthwise->project per row tile) for large-resolution inputs.
    in_specs = [pl.BlockSpec(blk, lambda bb, cc: (bb, 0, 0, cc)) for blk in in_blocks]
    in_specs += [w_spec, sb_spec, sb_spec]

    return pl.pallas_call(
        kernel,
        grid=grid,
        out_shape=jax.ShapeDtypeStruct((B, Ho, Wo, C), jnp.bfloat16),
        in_specs=in_specs,
        out_specs=pl.BlockSpec((1, Ho, Wo, tC), lambda bb, cc: (bb, 0, 0, cc)),
        compiler_params=_cparams(("parallel", "parallel")),
    )(*x_args, w9, s, b)


# ---------------------------- parameters ----------------------------

def _bn_scale_bias(c_pad):
    # TODO(synk): BatchNorm is folded in inference mode from freshly initialized
    # running stats (mean=0, var=1, gamma=1, beta=0); real trained weights would
    # fold running_mean/var/gamma/beta here instead.
    scale = jnp.full((c_pad,), 1.0 / math.sqrt(1.0 + BN_EPS), jnp.float32)
    bias = jnp.zeros((c_pad,), jnp.float32)
    return scale, bias


class _KeyGen:
    def __init__(self, seed):
        self._key = jax.random.PRNGKey(seed)

    def __call__(self):
        self._key, k = jax.random.split(self._key)
        return k


def init_mobilenet_v2_params(seed=0, n_class=1000, width_mult=1.0):
    """All channel dims are zero-padded to multiples of 128 so every Pallas
    block is lane-dense; padded activation channels stay exactly zero."""
    kg = _KeyGen(seed)

    def conv1x1(cin_r, cout_r, cin_p, cout_p):            # torch std sqrt(2/O)
        std = math.sqrt(2.0 / cout_r)
        w = std * jax.random.normal(kg(), (cin_r, cout_r), jnp.float32)
        wp = jnp.zeros((cin_p, cout_p), jnp.float32).at[:cin_r, :cout_r].set(w)
        return wp.astype(jnp.bfloat16)

    def dwconv3x3(c_r, c_p):                               # torch std sqrt(2/(9*C))
        std = math.sqrt(2.0 / (3 * 3 * c_r))
        w = std * jax.random.normal(kg(), (3, 3, c_r), jnp.float32)
        wp = jnp.zeros((3, 3, c_p), jnp.float32).at[:, :, :c_r].set(w)
        return wp.reshape(9, c_p)                          # (9, Cpad) f32 tap slab

    input_channel = int(32 * width_mult)
    last_channel = int(1280 * width_mult) if width_mult > 1.0 else 1280
    settings = [[1, 16, 1, 1], [6, 24, 2, 2], [6, 32, 3, 2], [6, 64, 4, 2],
                [6, 96, 3, 1], [6, 160, 3, 2], [6, 320, 1, 1]]

    params = {'n_class': n_class}

    # --- stem: im2col weight (K=27 padded to 32, Cout padded to 128) ---
    in_p = _pad_to(input_channel, _LANE)
    std = math.sqrt(2.0 / (3 * 3 * input_channel))
    w = std * jax.random.normal(kg(), (3, 3, 3, input_channel), jnp.float32)
    w = w.reshape(27, input_channel)
    stem_w = jnp.zeros((32, in_p), jnp.float32).at[:27, :input_channel].set(w)
    ss, sb = _bn_scale_bias(in_p)
    params['stem'] = {'w': stem_w.astype(jnp.bfloat16), 'scale': ss, 'bias': sb}

    blocks = []
    cur_r, cur_p = input_channel, in_p
    for t, c, n, s in settings:
        out_r = int(c * width_mult)
        out_p = _pad_to(out_r, _LANE)
        for i in range(n):
            stride = s if i == 0 else 1
            hid_r = int(round(cur_r * t))
            hid_p = _pad_to(hid_r, _LANE)
            blk = {'stride': stride,
                   'use_res': stride == 1 and cur_r == out_r}
            if t != 1:
                blk['expand_w'] = conv1x1(cur_r, hid_r, cur_p, hid_p)
                blk['expand_scale'], blk['expand_bias'] = _bn_scale_bias(hid_p)
            blk['dw_w'] = dwconv3x3(hid_r, hid_p)
            blk['dw_scale'], blk['dw_bias'] = _bn_scale_bias(hid_p)
            blk['proj_w'] = conv1x1(hid_r, out_r, hid_p, out_p)
            blk['proj_scale'], blk['proj_bias'] = _bn_scale_bias(out_p)
            blocks.append(blk)
            cur_r, cur_p = out_r, out_p
    params['blocks'] = blocks

    last_p = _pad_to(last_channel, _LANE)
    hs, hb = _bn_scale_bias(last_p)
    params['head'] = {'w': conv1x1(cur_r, last_channel, cur_p, last_p),
                      'scale': hs, 'bias': hb}

    ncls_p = _pad_to(n_class, _LANE)
    cw = 0.01 * jax.random.normal(kg(), (last_channel, n_class), jnp.float32)
    cwp = jnp.zeros((last_p, ncls_p), jnp.float32).at[:last_channel, :n_class].set(cw)
    params['classifier'] = {
        'w': cwp.astype(jnp.bfloat16),
        'b': jnp.zeros((ncls_p,), jnp.float32),
        'scale': jnp.ones((ncls_p,), jnp.float32),
    }
    return params


# ---------------------------- forward ----------------------------

def _inverted_residual(x, blk):
    B, H, W, C = x.shape
    y = x
    if 'expand_w' in blk:
        hidden = blk['expand_w'].shape[1]
        y = matmul_bn(y.reshape(B * H * W, C), blk['expand_w'],
                      blk['expand_scale'], blk['expand_bias'], relu6=True)
        y = y.reshape(B, H, W, hidden)
    # TODO(synk): fuse expand -> depthwise -> project per spatial row tile so
    # the 6x-expanded activation stays in VMEM instead of two HBM round-trips.
    y = depthwise_conv_bn_relu6(y, blk['dw_w'], blk['dw_scale'], blk['dw_bias'],
                                blk['stride'])
    Bo, Ho, Wo, Ch = y.shape
    O = blk['proj_w'].shape[1]
    res = x.reshape(B * H * W, C) if blk['use_res'] else None
    y = matmul_bn(y.reshape(Bo * Ho * Wo, Ch), blk['proj_w'],
                  blk['proj_scale'], blk['proj_bias'], relu6=False, residual=res)
    return y.reshape(Bo, Ho, Wo, O)


def mobilenet_v2_forward(params, x_nchw):
    # Input is NCHW (PyTorch convention); transpose once to NHWC.
    x = jnp.transpose(x_nchw, (0, 2, 3, 1)).astype(jnp.bfloat16)
    B, H, W, _ = x.shape

    # --- stem: 3x3 conv stride 2 pad 1 + BN + ReLU6 (im2col glue + Pallas matmul) ---
    # TODO(synk): fold the 9 strided im2col taps into the stem kernel via
    # per-tap BlockSpecs instead of materializing `patches` in HBM.
    stem = params['stem']
    Ho, Wo = H // 2, W // 2
    xpad = jnp.pad(x, ((0, 0), (1, 1), (1, 1), (0, 0)))
    taps = [xpad[:, di:di + 2 * Ho:2, dj:dj + 2 * Wo:2, :]
            for di in range(3) for dj in range(3)]
    patches = jnp.concatenate(taps, axis=-1).reshape(B * Ho * Wo, 27)
    k_pad = stem['w'].shape[0]
    patches = jnp.pad(patches, ((0, 0), (0, k_pad - 27)))    # K 27 -> 32 (aligned)
    cout = stem['w'].shape[1]
    x = matmul_bn(patches, stem['w'], stem['scale'], stem['bias'], relu6=True)
    x = x.reshape(B, Ho, Wo, cout)

    # --- inverted residual blocks ---
    for blk in params['blocks']:
        x = _inverted_residual(x, blk)

    # --- 1x1 conv to last_channel + BN + ReLU6 ---
    head = params['head']
    B2, H2, W2, C2 = x.shape
    O = head['w'].shape[1]
    x = matmul_bn(x.reshape(B2 * H2 * W2, C2), head['w'], head['scale'],
                  head['bias'], relu6=True).reshape(B2, H2, W2, O)

    # --- AvgPool2d(input_size//32) + adaptive_avg_pool2d(., 1) + squeeze (glue) ---
    pooled = jnp.mean(x.astype(jnp.float32), axis=(1, 2))    # (B, last_channel_pad)

    # --- classifier: Dropout(0.0) is identity; Linear via Pallas matmul ---
    cls = params['classifier']
    logits = matmul_bn(pooled, cls['w'], cls['scale'], cls['b'],
                       relu6=False, out_dtype=jnp.float32)
    return logits[:, :params['n_class']]                     # drop padded classes


# ---------------------------- self-checks & demo ----------------------------

def _run_unit_checks():
    # Small sanity checks of both Pallas kernels against pure-JAX references.
    ks = jax.random.split(jax.random.PRNGKey(123), 8)

    # Fused matmul + BN + residual + ReLU6 (exercises M tiling and 256-wide N).
    M, K, N = 256, 128, 512
    x = jax.random.normal(ks[0], (M, K), jnp.float32)
    w = 0.2 * jax.random.normal(ks[1], (K, N), jnp.float32)
    s = 1.0 + 0.1 * jax.random.normal(ks[2], (N,), jnp.float32)
    b = 0.1 * jax.random.normal(ks[3], (N,), jnp.float32)
    r = jax.random.normal(ks[4], (M, N), jnp.float32)
    got = matmul_bn(x, w, s, b, relu6=True, residual=r).astype(jnp.float32)
    xb = x.astype(jnp.bfloat16).astype(jnp.float32)
    wb = w.astype(jnp.bfloat16).astype(jnp.float32)
    rb = r.astype(jnp.bfloat16).astype(jnp.float32)
    ref = jnp.clip(jnp.dot(xb, wb) * s[None, :] + b[None, :] + rb, 0.0, 6.0)
    assert bool(jnp.allclose(got, ref, rtol=5e-2, atol=5e-2)), "matmul_bn mismatch"

    # Depthwise 3x3 + BN + ReLU6, stride 1 and direct stride 2 (C=256 tile).
    B, H, W, C = 2, 8, 8, 256
    xd = jax.random.normal(ks[5], (B, H, W, C), jnp.float32)
    wd = 0.3 * jax.random.normal(ks[6], (3, 3, C), jnp.float32)
    sd = 1.0 + 0.1 * jax.random.normal(ks[7], (C,), jnp.float32)
    bd = 0.1 * jax.random.normal(ks[2], (C,), jnp.float32)
    xdb = xd.astype(jnp.bfloat16).astype(jnp.float32)
    for stride in (1, 2):
        got = depthwise_conv_bn_relu6(xd, wd.reshape(9, C), sd, bd,
                                      stride).astype(jnp.float32)
        ref = jax.lax.conv_general_dilated(
            xdb, wd.reshape(3, 3, 1, C).astype(jnp.float32),
            window_strides=(stride, stride), padding=((1, 1), (1, 1)),
            dimension_numbers=('NHWC', 'HWIO', 'NHWC'), feature_group_count=C)
        ref = jnp.clip(ref * sd.reshape(1, 1, 1, C) + bd.reshape(1, 1, 1, C), 0.0, 6.0)
        assert bool(jnp.allclose(got, ref, rtol=5e-2, atol=5e-2)), \
            f"depthwise stride={stride} mismatch"


if __name__ == "__main__":
    _run_unit_checks()

    n_class = 1000
    params = init_mobilenet_v2_params(seed=0, n_class=n_class)
    x = jax.random.normal(jax.random.PRNGKey(0), (2, 3, 32, 32), jnp.float32)  # NCHW
    forward = jax.jit(functools.partial(mobilenet_v2_forward, params))
    out = jax.block_until_ready(forward(x))
    assert out.shape == (2, n_class), out.shape
    assert bool(jnp.all(jnp.isfinite(out)))
    print("KERNEL_OK")
</pallas_src>

<mosaic_0001>
module attributes {stable_mosaic.version = 11 : i64} {
  func.func @_matmul_bn_kernel(%arg0: i32, %arg1: i32, %arg2: memref<256x128xbf16, #tpu.memory_space<vmem>>, %arg3: memref<128x256xbf16, #tpu.memory_space<vmem>>, %arg4: memref<1x256xf32, #tpu.memory_space<vmem>>, %arg5: memref<1x256xf32, #tpu.memory_space<vmem>>, %arg6: memref<256x256xbf16, #tpu.memory_space<vmem>>, %arg7: memref<256x256xbf16, #tpu.memory_space<vmem>>) attributes {dimension_semantics = [#tpu.dimension_semantics<parallel>, #tpu.dimension_semantics<parallel>], iteration_bounds = array<i64: 1, 2>, scalar_prefetch = 0 : i64, scratch_operands = 0 : i64, tpu.core_type = #tpu.core_type<tc>, window_params = [{transform_indices = @transform_0, window_bounds = array<i64: 256, 128>}, {transform_indices = @transform_1, window_bounds = array<i64: 128, 256>}, {transform_indices = @transform_2, window_bounds = array<i64: 1, 256>}, {transform_indices = @transform_3, window_bounds = array<i64: 1, 256>}, {transform_indices = @transform_4, window_bounds = array<i64: 256, 256>}, {transform_indices = @transform_5, window_bounds = array<i64: 256, 256>}]} {
    %c0 = arith.constant 0 : index
    %c0_0 = arith.constant 0 : index
    %0 = vector.load %arg2[%c0, %c0_0] : memref<256x128xbf16, #tpu.memory_space<vmem>>, vector<256x128xbf16>
    %c0_1 = arith.constant 0 : index
    %c0_2 = arith.constant 0 : index
    %1 = vector.load %arg3[%c0_1, %c0_2] : memref<128x256xbf16, #tpu.memory_space<vmem>>, vector<128x256xbf16>
    %cst = arith.constant dense<0.000000e+00> : vector<256x256xf32>
    %2 = tpu.matmul %0, %1, %cst {dimension_numbers = #tpu.dot_dimension_numbers<[1], [0], [0], [1], [0, 0, 1, 1], [], []>} : vector<256x128xbf16>, vector<128x256xbf16>, vector<256x256xf32> -> vector<256x256xf32>
    %c0_3 = arith.constant 0 : index
    %c0_4 = arith.constant 0 : index
    %3 = vector.load %arg4[%c0_3, %c0_4] : memref<1x256xf32, #tpu.memory_space<vmem>>, vector<1x256xf32>
    %4 = vector.broadcast %3 : vector<1x256xf32> to vector<256x256xf32>
    %5 = arith.mulf %2, %4 : vector<256x256xf32>
    %c0_5 = arith.constant 0 : index
    %c0_6 = arith.constant 0 : index
    %6 = vector.load %arg5[%c0_5, %c0_6] : memref<1x256xf32, #tpu.memory_space<vmem>>, vector<1x256xf32>
    %7 = vector.broadcast %6 : vector<1x256xf32> to vector<256x256xf32>
    %8 = arith.addf %5, %7 : vector<256x256xf32>
    %c0_7 = arith.constant 0 : index
    %c0_8 = arith.constant 0 : index
    %9 = vector.load %arg6[%c0_7, %c0_8] : memref<256x256xbf16, #tpu.memory_space<vmem>>, vector<256x256xbf16>
    %10 = arith.extf %9 : vector<256x256xbf16> to vector<256x256xf32>
    %11 = arith.addf %8, %10 : vector<256x256xf32>
    %cst_9 = arith.constant 0.000000e+00 : f32
    %12 = vector.broadcast %cst_9 : f32 to vector<256x256xf32>
    %13 = arith.maximumf %11, %12 : vector<256x256xf32>
    %cst_10 = arith.constant 6.000000e+00 : f32
    %14 = vector.broadcast %cst_10 : f32 to vector<256x256xf32>
    %15 = arith.minimumf %13, %14 : vector<256x256xf32>
    %16 = arith.truncf %15 : vector<256x256xf32> to vector<256x256xbf16>
    %c0_11 = arith.constant 0 : index
    %c0_12 = arith.constant 0 : index
    %17 = vector.load %arg7[%c0_11, %c0_12] : memref<256x256xbf16, #tpu.memory_space<vmem>>, vector<256x256xbf16>
    tpu.vector_store %arg7[%c0_11, %c0_12], %16 {strides = array<i32>} : memref<256x256xbf16, #tpu.memory_space<vmem>>, vector<256x256xbf16>,
    return
  }
  func.func @transform_0(%arg0: i32, %arg1: i32) -> (i32, i32) {
    %c0_i32 = arith.constant 0 : i32
    %c0_i32_0 = arith.constant 0 : i32
    return %arg0, %c0_i32 : i32, i32
  }
  func.func @transform_1(%arg0: i32, %arg1: i32) -> (i32, i32) {
    %c0_i32 = arith.constant 0 : i32
    %c0_i32_0 = arith.constant 0 : i32
    return %c0_i32, %arg1 : i32, i32
  }
  func.func @transform_2(%arg0: i32, %arg1: i32) -> (i32, i32) {
    %c0_i32 = arith.constant 0 : i32
    %c0_i32_0 = arith.constant 0 : i32
    return %c0_i32, %arg1 : i32, i32
  }
  func.func @transform_3(%arg0: i32, %arg1: i32) -> (i32, i32) {
    %c0_i32 = arith.constant 0 : i32
    %c0_i32_0 = arith.constant 0 : i32
    return %c0_i32, %arg1 : i32, i32
  }
  func.func @transform_4(%arg0: i32, %arg1: i32) -> (i32, i32) {
    %c0_i32 = arith.constant 0 : i32
    return %arg0, %arg1 : i32, i32
  }
  func.func @transform_5(%arg0: i32, %arg1: i32) -> (i32, i32) {
    %c0_i32 = arith.constant 0 : i32
    return %arg0, %arg1 : i32, i32
  }
}

</mosaic_0001>

<llo_original>
// kernel: tpu_custom_call.1
$region0: #{tpu_custom_call.1}
  #allocation0 [shape = 'u32[]', space=smem, size = 0x4, offset = 0x4, fixed_abs, tag = 'smem constant byte address 0x4 - core index']
  #allocation1 [shape = 'u32[144,128]{1,0:T(1,128)}', space=vmem, size = 0x12000, scoped, tag = 'internal scratch']
  %s0 = inlined_call_operand.hbm [shape: bf16[256,128], index: 0, kind: input, shape index: {}]
  %s1 = inlined_call_operand.hbm [shape: bf16[128,512], index: 1, kind: input, shape index: {}]
  %s2 = inlined_call_operand.vmem [shape: f32[1,512], index: 2, kind: input, shape index: {}]
  %s3 = inlined_call_operand.vmem [shape: f32[1,512], index: 3, kind: input, shape index: {}]
  %s4 = inlined_call_operand.hbm [shape: bf16[256,512], index: 4, kind: input, shape index: {}]
  %s5 = inlined_call_operand.hbm [shape: bf16[256,512], index: 5, kind: output, shape index: {}]
  %s6 = sld [smem:[#allocation0]]
  $region65: #{tpu_custom_call.1} parent=0
    _
  %s8 = ssub.s32 1, %s6
  %s9 = scalar_select 0, %s8, %s6
  $region1: #{tpu_custom_call.1} parent=0
    #allocation2 [shape = 'u8[65536]{0}', space=vmem, size = 0x10000, scoped, tag = 'input window, operand 0, single buffered']
    #allocation3 [shape = 's32[2]{0}', space=sflag, size = 0x8, scoped, tag = 'scoped memory for tpu_custom_call.1']
    #allocation4 [shape = 's32[2]{0}', space=sflag, size = 0x8, scoped, tag = 'scoped memory for tpu_custom_call.1']
    #allocation5 [shape = 'u8[131072]{0}', space=vmem, size = 0x20000, scoped, tag = 'input window, operand 1']
    #allocation6 [shape = 's32[2]{0}', space=sflag, size = 0x8, scoped, tag = 'scoped memory for tpu_custom_call.1']
    #allocation7 [shape = 'u8[262144]{0}', space=vmem, size = 0x40000, scoped, tag = 'input window, operand 4']
    #allocation8 [shape = 'u8[262144]{0}', space=vmem, size = 0x40000, scoped, tag = 'output window, operand 0']
    %10 = vsyncpa [#allocation3], 0
    %11 = vsyncpa [#allocation6], 0
    %s12 = scalar_lea.sflag [#allocation6], 1
    %13 = vsyncpa %s12, 0
    %14 = vsyncpa [#allocation4], 0
    %s15 = scalar_lea.sflag [#allocation4], 1
    %16 = vsyncpa %s15, 0
    loop: start=0, step=1, limit=4
    $region2: #{tpu_custom_call.1} parent=1 // loop_pre_header
      _
    $region3: #{tpu_custom_call.1} parent=1 // loop_header
      %s18 = sphi 0, %s22
      %p19 = scmp.ge.s32.totalorder %s18, 4
      %s25 = sphi 0, %s37
      %s26 = sphi 0, %s33
      %s27 = sphi 0, %s25
      %s28 = sphi 0, %s26
      %s29 = sphi 0, %s27
      %s30 = sphi 0, %s28
      %s40 = sphi 0, %s42
      %s43 = sphi 0, %s40
      %s44 = sphi 0, %s43
      %s60 = sphi 0, %s44
      %s66 = sphi 0, %s68
      %s69 = sphi 0, %s66
      %s70 = sphi 0, %s69
      %s86 = sphi 0, %s70
      %s92 = sphi 0, %s94
      %s95 = sphi 0, %s92
      %s96 = sphi 0, %s95
      %s112 = sphi 0, %s96
      %s118 = sphi 0, %s120
      %s121 = sphi 0, %s118
      %s122 = sphi 0, %s121
      %s138 = sphi 0, %s122
      %s146 = sphi 0, %s148
      %s149 = sphi 0, %s146
      %s150 = sphi 0, %s149
      %s166 = sphi 0, %s150
      %s174 = sphi 0, %s176
      %s177 = sphi 0, %s174
      %s178 = sphi 0, %s177
      %s194 = sphi 0, %s178
    $region4: #{tpu_custom_call.1} parent=1 // loop_header_branch
      %21 = sbr.rel (%p19) target = $region8
    $region5: #{tpu_custom_call.1} parent=1 // loop_body
      %s23 = ssub.s32 %s18, 1
      %s24 = ssub.s32 %s18, 2
      %s31 = sadd.s32 1, %s26
      %p32 = scmp.ge.s32.totalorder %s31, 2
      %s33 = scalar_select %p32, 0, %s31
      %s34 = sadd.s32 1, %s25
      %s35 = scalar_select %p32, %s34, %s25
      %p36 = scmp.ge.s32.totalorder %s35, 1
      %s37 = scalar_select %p36, 0, %s35
      %s38 = ssub.s32 %s25, %s37
      %p39 = scmp.eq.s32.totalorder %s38, 0
      %s41 = sadd.s32 %s40, 1
      %s42 = scalar_select %p39, %s40, %s41
      %p45 = pneg %p39
      %p46 = scmp.eq.s32.totalorder %s18, 1
      %p47 = por %p45, %p46
      %p48 = scmp.ne.s32.totalorder %s40, %s43
      %p49 = scmp.eq.s32.totalorder %s18, 0
      %p50 = por %p48, %p49
      %p51 = scmp.ne.s32.totalorder %s40, %s43
      %p52 = scmp.eq.s32.totalorder %s23, 1
      %p53 = por %p51, %p52
      %p54 = scmp.ne.s32.totalorder %s43, %s44
      %p55 = scmp.eq.s32.totalorder %s23, 0
      %p56 = por %p54, %p55
      %p57 = scmp.ne.s32.totalorder %s43, %s44
      %p58 = scmp.eq.s32.totalorder %s24, 1
      %p59 = por %p57, %p58
      %p61 = scmp.ne.s32.totalorder %s44, %s60
      %p62 = scmp.eq.s32.totalorder %s24, 0
      %p63 = por %p61, %p62
      %s64 = ssub.s32 %s26, %s33
      %p65 = scmp.eq.s32.totalorder %s64, 0
      %s67 = sadd.s32 %s66, 1
      %s68 = scalar_select %p65, %s66, %s67
      %p71 = pneg %p65
      %p72 = scmp.eq.s32.totalorder %s18, 1
      %p73 = por %p71, %p72
      %p74 = scmp.ne.s32.totalorder %s66, %s69
      %p75 = scmp.eq.s32.totalorder %s18, 0
      %p76 = por %p74, %p75
      %p77 = scmp.ne.s32.totalorder %s66, %s69
      %p78 = scmp.eq.s32.totalorder %s23, 1
      %p79 = por %p77, %p78
      %p80 = scmp.ne.s32.totalorder %s69, %s70
      %p81 = scmp.eq.s32.totalorder %s23, 0
      %p82 = por %p80, %p81
      %p83 = scmp.ne.s32.totalorder %s69, %s70
      %p84 = scmp.eq.s32.totalorder %s24, 1
      %p85 = por %p83, %p84
      %p87 = scmp.ne.s32.totalorder %s70, %s86
      %p88 = scmp.eq.s32.totalorder %s24, 0
      %p89 = por %p87, %p88
      %s90 = ssub.s32 %s26, %s33
      %p91 = scmp.eq.s32.totalorder %s90, 0
      %s93 = sadd.s32 %s92, 1
      %s94 = scalar_select %p91, %s92, %s93
      %p97 = pneg %p91
      %p98 = scmp.eq.s32.totalorder %s18, 1
      %p99 = por %p97, %p98
      %p100 = scmp.ne.s32.totalorder %s92, %s95
      %p101 = scmp.eq.s32.totalorder %s18, 0
      %p102 = por %p100, %p101
      %p103 = scmp.ne.s32.totalorder %s92, %s95
      %p104 = scmp.eq.s32.totalorder %s23, 1
      %p105 = por %p103, %p104
      %p106 = scmp.ne.s32.totalorder %s95, %s96
      %p107 = scmp.eq.s32.totalorder %s23, 0
      %p108 = por %p106, %p107
      %p109 = scmp.ne.s32.totalorder %s95, %s96
      %p110 = scmp.eq.s32.totalorder %s24, 1
      %p111 = por %p109, %p110
      %p113 = scmp.ne.s32.totalorder %s96, %s112
      %p114 = scmp.eq.s32.totalorder %s24, 0
      %p115 = por %p113, %p114
      %s116 = ssub.s32 %s26, %s33
      %p117 = scmp.eq.s32.totalorder %s116, 0
      %s119 = sadd.s32 %s118, 1
      %s120 = scalar_select %p117, %s118, %s119
      %p123 = pneg %p117
      %p124 = scmp.eq.s32.totalorder %s18, 1
      %p125 = por %p123, %p124
      %p126 = scmp.ne.s32.totalorder %s118, %s121
      %p127 = scmp.eq.s32.totalorder %s18, 0
      %p128 = por %p126, %p127
      %p129 = scmp.ne.s32.totalorder %s118, %s121
      %p130 = scmp.eq.s32.totalorder %s23, 1
      %p131 = por %p129, %p130
      %p132 = scmp.ne.s32.totalorder %s121, %s122
      %p133 = scmp.eq.s32.totalorder %s23, 0
      %p134 = por %p132, %p133
      %p135 = scmp.ne.s32.totalorder %s121, %s122
      %p136 = scmp.eq.s32.totalorder %s24, 1
      %p137 = por %p135, %p136
      %p139 = scmp.ne.s32.totalorder %s122, %s138
      %p140 = scmp.eq.s32.totalorder %s24, 0
      %p141 = por %p139, %p140
      %s142 = ssub.s32 %s25, %s37
      %s143 = ssub.s32 %s26, %s33
      %s144 = sor.u32 %s142, %s143
      %p145 = scmp.eq.s32.totalorder %s144, 0
      %s147 = sadd.s32 %s146, 1
      %s148 = scalar_select %p145, %s146, %s147
      %p151 = pneg %p145
      %p152 = scmp.eq.s32.totalorder %s18, 1
      %p153 = por %p151, %p152
      %p154 = scmp.ne.s32.totalorder %s146, %s149
      %p155 = scmp.eq.s32.totalorder %s18, 0
      %p156 = por %p154, %p155
      %p157 = scmp.ne.s32.totalorder %s146, %s149
      %p158 = scmp.eq.s32.totalorder %s23, 1
      %p159 = por %p157, %p158
      %p160 = scmp.ne.s32.totalorder %s149, %s150
      %p161 = scmp.eq.s32.totalorder %s23, 0
      %p162 = por %p160, %p161
      %p163 = scmp.ne.s32.totalorder %s149, %s150
      %p164 = scmp.eq.s32.totalorder %s24, 1
      %p165 = por %p163, %p164
      %p167 = scmp.ne.s32.totalorder %s150, %s166
      %p168 = scmp.eq.s32.totalorder %s24, 0
      %p169 = por %p167, %p168
      %s170 = ssub.s32 %s25, %s37
      %s171 = ssub.s32 %s26, %s33
      %s172 = sor.u32 %s170, %s171
      %p173 = scmp.eq.s32.totalorder %s172, 0
      %s175 = sadd.s32 %s174, 1
      %s176 = scalar_select %p173, %s174, %s175
      %p179 = pneg %p173
      %p180 = scmp.eq.s32.totalorder %s18, 1
      %p181 = por %p179, %p180
      %p182 = scmp.ne.s32.totalorder %s174, %s177
      %p183 = scmp.eq.s32.totalorder %s18, 0
      %p184 = por %p182, %p183
      %p185 = scmp.ne.s32.totalorder %s174, %s177
      %p186 = scmp.eq.s32.totalorder %s23, 1
      %p187 = por %p185, %p186
      %p188 = scmp.ne.s32.totalorder %s177, %s178
      %p189 = scmp.eq.s32.totalorder %s23, 0
      %p190 = por %p188, %p189
      %p191 = scmp.ne.s32.totalorder %s177, %s178
      %p192 = scmp.eq.s32.totalorder %s24, 1
      %p193 = por %p191, %p192
      %p195 = scmp.ne.s32.totalorder %s178, %s194
      %p196 = scmp.eq.s32.totalorder %s24, 0
      %p197 = por %p195, %p196
      %p198 = scmp.le.s32.totalorder 1, %s18
      %p199 = scmp.lt.s32.totalorder %s18, 3
      %p200 = pnand %p198, %p199
      %p201 = pneg %p200
      // Predicated region
      $region9: #{tpu_custom_call.1} parent=5 // pred_check
        _
      $region10: #{tpu_custom_call.1} parent=5 // pred_check_branch
        %203 = sbr.rel (%p200) target = $region12
      $region11: #{tpu_custom_call.1} parent=5 // pred_region
        %s204 = ssub.s32 %s18, 1
        // Predicated region
        $region13: #{tpu_custom_call.1} parent=11 // pred_check
          %p205 = pneg %p56
        $region14: #{tpu_custom_call.1} parent=11 // pred_check_branch
          %207 = sbr.rel (%p205) target = $region16
        $region15: #{tpu_custom_call.1} parent=11 // pred_region
          %s208 = smul.u32 32, %s27
          %s210 = ssub.s32 2048, 2048
          %211 = vsyncadd [#allocation3], %s210
          %s212 = smul.addr %s208, 64
          %s213 = scalar_lea.hbm %s0, %s212
          %s214 = sshll.u32 [#allocation2], 4
          %s215 = int_to_ptr.vmem [resolvable:$true] %s214
          %220 = dma.hbm_to_vmem [thread:$0]  %s213, 2048, %s215, [#allocation3], 64, 64, 4
        $region16: #{tpu_custom_call.1} parent=11 // pred_fallthru
          _
      $region12: #{tpu_custom_call.1} parent=5 // pred_fallthru
        _
      %p221 = scmp.lt.s32.totalorder %s18, 2
      // Predicated region
      $region17: #{tpu_custom_call.1} parent=5 // pred_check
        %p222 = pneg %p221
      $region18: #{tpu_custom_call.1} parent=5 // pred_check_branch
        %224 = sbr.rel (%p222) target = $region20
      $region19: #{tpu_custom_call.1} parent=5 // pred_region
        // Predicated region
        $region21: #{tpu_custom_call.1} parent=19 // pred_check
          %p225 = pneg %p76
        $region22: #{tpu_custom_call.1} parent=19 // pred_check_branch
          %227 = sbr.rel (%p225) target = $region24
        $region23: #{tpu_custom_call.1} parent=19 // pred_region
          %s228 = sand.u32 %s18, 1
          %s229 = scalar_lea.sflag [#allocation6], %s228
          %s230 = sand.u32 %s66, 1
          %s231 = smul.addr %s230, 128
          %s232 = scalar_lea.vmem [#allocation5], %s231
          %s233 = smul.u32 2, %s26
          %s235 = ssub.s32 2048, 2048
          %236 = vsyncadd %s229, %s235
          %s237 = smul.addr %s233, 64
          %s238 = scalar_lea.hbm %s1, %s237
          %s239 = sshll.u32 %s232, 4
          %s240 = int_to_ptr.vmem [resolvable:$true] %s239
          %245 = dma.hbm_to_vmem [thread:$0]  %s238, 2048, %s240, %s229, 256, 128, 8
        $region24: #{tpu_custom_call.1} parent=19 // pred_fallthru
          _
        // Predicated region
        $region25: #{tpu_custom_call.1} parent=19 // pred_check
          %p246 = pneg %p102
        $region26: #{tpu_custom_call.1} parent=19 // pred_check_branch
          %248 = sbr.rel (%p246) target = $region28
        $region27: #{tpu_custom_call.1} parent=19 // pred_region
          %s249 = smul.u32 2, %s26
          %p250 = scmp.lt.s32.totalorder %s249, 3
          %s251 = scalar_select %p250, %s249, 3
          %s252 = scalar_lea.vmem %s2, %s251
          %s253 = smul.u32 2, %s26
        $region28: #{tpu_custom_call.1} parent=19 // pred_fallthru
          _
        // Predicated region
        $region29: #{tpu_custom_call.1} parent=19 // pred_check
          %p254 = pneg %p128
        $region30: #{tpu_custom_call.1} parent=19 // pred_check_branch
          %256 = sbr.rel (%p254) target = $region32
        $region31: #{tpu_custom_call.1} parent=19 // pred_region
          %s257 = smul.u32 2, %s26
          %p258 = scmp.lt.s32.totalorder %s257, 3
          %s259 = scalar_select %p258, %s257, 3
          %s260 = scalar_lea.vmem %s3, %s259
          %s261 = smul.u32 2, %s26
        $region32: #{tpu_custom_call.1} parent=19 // pred_fallthru
          _
        // Predicated region
        $region33: #{tpu_custom_call.1} parent=19 // pred_check
          %p262 = pneg %p156
        $region34: #{tpu_custom_call.1} parent=19 // pred_check_branch
          %264 = sbr.rel (%p262) target = $region36
        $region35: #{tpu_custom_call.1} parent=19 // pred_region
          %s265 = sand.u32 %s18, 1
          %s266 = scalar_lea.sflag [#allocation6], %s265
          %s267 = sand.u32 %s146, 1
          %s268 = smul.addr %s267, 256
          %s269 = scalar_lea.vmem [#allocation7], %s268
          %s270 = smul.u32 32, %s25
          %s271 = smul.u32 2, %s26
          %s273 = ssub.s32 4096, 4096
          %274 = vsyncadd %s266, %s273
          %s275 = smul.addr %s270, 4
          %s276 = sadd.s32 %s271, %s275
          %s277 = smul.addr %s276, 64
          %s278 = scalar_lea.hbm %s4, %s277
          %s279 = sshll.u32 %s269, 4
          %s280 = int_to_ptr.vmem [resolvable:$true] %s279
          %285 = dma.hbm_to_vmem [thread:$0]  %s278, 4096, %s280, %s266, 256, 128, 8
        $region36: #{tpu_custom_call.1} parent=19 // pred_fallthru
          _
      $region20: #{tpu_custom_call.1} parent=5 // pred_fallthru
        _
      %p286 = scmp.le.s32.totalorder 1, %s18
      %p287 = scmp.lt.s32.totalorder %s18, 3
      %p288 = pnand %p286, %p287
      %p289 = pneg %p288
      // Predicated region
      $region37: #{tpu_custom_call.1} parent=5 // pred_check
        _
      $region38: #{tpu_custom_call.1} parent=5 // pred_check_branch
        %291 = sbr.rel (%p288) target = $region40
      $region39: #{tpu_custom_call.1} parent=5 // pred_region
        %s292 = ssub.s32 %s18, 1
        // Predicated region
        $region41: #{tpu_custom_call.1} parent=39 // pred_check
          %p293 = pneg %p56
        $region42: #{tpu_custom_call.1} parent=39 // pred_check_branch
          %295 = sbr.rel (%p293) target = $region44
        $region43: #{tpu_custom_call.1} parent=39 // pred_region
          %296 = dma.done [#allocation3], 2048
        $region44: #{tpu_custom_call.1} parent=39 // pred_fallthru
          _
        %s297 = sand.u32 %s23, 1
        %s298 = scalar_lea.sflag [#allocation6], %s297
        %s299 = sand.u32 %s69, 1
        %s300 = smul.addr %s299, 128
        %s301 = scalar_lea.vmem [#allocation5], %s300
        // Predicated region
        $region45: #{tpu_custom_call.1} parent=39 // pred_check
          %p302 = pneg %p82
        $region46: #{tpu_custom_call.1} parent=39 // pred_check_branch
          %304 = sbr.rel (%p302) target = $region48
        $region47: #{tpu_custom_call.1} parent=39 // pred_region
          %305 = dma.done %s298, 2048
        $region48: #{tpu_custom_call.1} parent=39 // pred_fallthru
          _
        %s306 = sand.u32 %s23, 1
        %s307 = scalar_lea.sflag [#allocation6], %s306
        %s308 = sand.u32 %s149, 1
        %s309 = smul.addr %s308, 256
        %s310 = scalar_lea.vmem [#allocation7], %s309
        // Predicated region
        $region49: #{tpu_custom_call.1} parent=39 // pred_check
          %p311 = pneg %p162
        $region50: #{tpu_custom_call.1} parent=39 // pred_check_branch
          %313 = sbr.rel (%p311) target = $region52
        $region51: #{tpu_custom_call.1} parent=39 // pred_region
          %314 = dma.done %s307, 4096
        $region52: #{tpu_custom_call.1} parent=39 // pred_fallthru
          _
        %p315 = pneg %p56
        %p316 = pneg %p53
        %s317 = sand.u32 %s23, 1
        %s318 = scalar_lea.sflag [#allocation6], %s317
        %s319 = sand.u32 %s69, 1
        %s320 = smul.addr %s319, 128
        %s321 = scalar_lea.vmem [#allocation5], %s320
        %p322 = pneg %p82
        %p323 = pneg %p79
        %s324 = smul.u32 2, %s28
        %p325 = scmp.lt.s32.totalorder %s324, 3
        %s326 = scalar_select %p325, %s324, 3
        %s327 = scalar_lea.vmem %s2, %s326
        %p328 = pneg %p108
        %p329 = pneg %p105
        %s330 = smul.u32 2, %s28
        %p331 = scmp.lt.s32.totalorder %s330, 3
        %s332 = scalar_select %p331, %s330, 3
        %s333 = scalar_lea.vmem %s3, %s332
        %p334 = pneg %p134
        %p335 = pneg %p131
        %s336 = sand.u32 %s23, 1
        %s337 = scalar_lea.sflag [#allocation6], %s336
        %s338 = sand.u32 %s149, 1
        %s339 = smul.addr %s338, 256
        %s340 = scalar_lea.vmem [#allocation7], %s339
        %p341 = pneg %p162
        %p342 = pneg %p159
        %p343 = pneg %p190
        %p344 = pneg %p187
        %s345 = sand.u32 %s177, 1
        %s346 = scalar_lea.sflag [#allocation4], %s345
        %s347 = sand.u32 %s177, 1
        %s348 = smul.addr %s347, 256
        %s349 = scalar_lea.vmem [#allocation8], %s348
        %s350 = smul.u32 32, %s27
        %s351 = smul.u32 2, %s28
        %s352 = smul.u32 2, %s28
        %p353 = scmp.lt.s32.totalorder %s352, 3
        %s354 = scalar_select %p353, %s352, 3
        %s355 = scalar_lea.vmem %s2, %s354
        %s356 = smul.u32 2, %s28
        %s357 = smul.u32 2, %s28
        %p358 = scmp.lt.s32.totalorder %s357, 3
        %s359 = scalar_select %p358, %s357, 3
        %s360 = scalar_lea.vmem %s3, %s359
        %s361 = smul.u32 2, %s28
        %s362 = smul.u32 32, %s27
        %s363 = smul.u32 2, %s28
        %s364 = smul.u32 32, %s27
        %s365 = smul.u32 2, %s28
        %v367 = vld [vmem:[#allocation2] sm:$0xf]
        %v368 = vld [vmem:[#allocation2 + $0x4] sm:$0xf]
        %v369 = vld [vmem:[#allocation2 + $0x8] sm:$0xf]
        %v370 = vld [vmem:[#allocation2 + $0xc] sm:$0xf]
        %v371 = vld [vmem:[#allocation2 + $0x10] sm:$0xf]
        %v372 = vld [vmem:[#allocation2 + $0x14] sm:$0xf]
        %v373 = vld [vmem:[#allocation2 + $0x18] sm:$0xf]
        %v374 = vld [vmem:[#allocation2 + $0x1c] sm:$0xf]
        %v375 = vld [vmem:[#allocation2 + $0x20] sm:$0xf]
        %v376 = vld [vmem:[#allocation2 + $0x24] sm:$0xf]
        %v377 = vld [vmem:[#allocation2 + $0x28] sm:$0xf]
        %v378 = vld [vmem:[#allocation2 + $0x2c] sm:$0xf]
        %v379 = vld [vmem:[#allocation2 + $0x30] sm:$0xf]
        %v380 = vld [vmem:[#allocation2 + $0x34] sm:$0xf]
        %v381 = vld [vmem:[#allocation2 + $0x38] sm:$0xf]
        %v382 = vld [vmem:[#allocation2 + $0x3c] sm:$0xf]
        %v383 = vld [vmem:[#allocation2 + $0x40] sm:$0xf]
        %v384 = vld [vmem:[#allocation2 + $0x44] sm:$0xf]
        %v385 = vld [vmem:[#allocation2 + $0x48] sm:$0xf]
        %v386 = vld [vmem:[#allocation2 + $0x4c] sm:$0xf]
        %v387 = vld [vmem:[#allocation2 + $0x50] sm:$0xf]
        %v388 = vld [vmem:[#allocation2 + $0x54] sm:$0xf]
        %v389 = vld [vmem:[#allocation2 + $0x58] sm:$0xf]
        %v390 = vld [vmem:[#allocation2 + $0x5c] sm:$0xf]
        %v391 = vld [vmem:[#allocation2 + $0x60] sm:$0xf]
        %v392 = vld [vmem:[#allocation2 + $0x64] sm:$0xf]
        %v393 = vld [vmem:[#allocation2 + $0x68] sm:$0xf]
        %v394 = vld [vmem:[#allocation2 + $0x6c] sm:$0xf]
        %v395 = vld [vmem:[#allocation2 + $0x70] sm:$0xf]
        %v396 = vld [vmem:[#allocation2 + $0x74] sm:$0xf]
        %v397 = vld [vmem:[#allocation2 + $0x78] sm:$0xf]
        %v398 = vld [vmem:[#allocation2 + $0x7c] sm:$0xf]
        %v399 = vld [vmem:[%s301] sm:$0xff]
        %v400 = vld [vmem:[%s301 + $0x8] sm:$0xff]
        %v401 = vld [vmem:[%s301 + $0x10] sm:$0xff]
        %v402 = vld [vmem:[%s301 + $0x18] sm:$0xff]
        %v403 = vld [vmem:[%s301 + $0x20] sm:$0xff]
        %v404 = vld [vmem:[%s301 + $0x28] sm:$0xff]
        %v405 = vld [vmem:[%s301 + $0x30] sm:$0xff]
        %v406 = vld [vmem:[%s301 + $0x38] sm:$0xff]
        %v407 = vld [vmem:[%s301 + $0x40] sm:$0xff]
        %v408 = vld [vmem:[%s301 + $0x48] sm:$0xff]
        %v409 = vld [vmem:[%s301 + $0x50] sm:$0xff]
        %v410 = vld [vmem:[%s301 + $0x58] sm:$0xff]
        %v411 = vld [vmem:[%s301 + $0x60] sm:$0xff]
        %v412 = vld [vmem:[%s301 + $0x68] sm:$0xff]
        %v413 = vld [vmem:[%s301 + $0x70] sm:$0xff]
        %v414 = vld [vmem:[%s301 + $0x78] sm:$0xff]
        %v447 = vunpack.c.l.b16 %v367
        %v448 = vunpack.c.l.b16 %v368
        %v449 = vunpack.c.l.b16 %v369
        %v450 = vunpack.c.l.b16 %v370
        %v451 = vunpack.c.l.b16 %v371
        %v452 = vunpack.c.l.b16 %v372
        %v453 = vunpack.c.l.b16 %v373
        %v454 = vunpack.c.l.b16 %v374
        %v455 = vunpack.c.l.b16 %v375
        %v456 = vunpack.c.l.b16 %v376
        %v457 = vunpack.c.l.b16 %v377
        %v458 = vunpack.c.l.b16 %v378
        %v459 = vunpack.c.l.b16 %v379
        %v460 = vunpack.c.l.b16 %v380
        %v461 = vunpack.c.l.b16 %v381
        %v462 = vunpack.c.l.b16 %v382
        %v463 = vunpack.c.l.b16 %v383
        %v464 = vunpack.c.l.b16 %v384
        %v465 = vunpack.c.l.b16 %v385
        %v466 = vunpack.c.l.b16 %v386
        %v467 = vunpack.c.l.b16 %v387
        %v468 = vunpack.c.l.b16 %v388
        %v469 = vunpack.c.l.b16 %v389
        %v470 = vunpack.c.l.b16 %v390
        %v471 = vunpack.c.l.b16 %v391
        %v472 = vunpack.c.l.b16 %v392
        %v473 = vunpack.c.l.b16 %v393
        %v474 = vunpack.c.l.b16 %v394
        %v475 = vunpack.c.l.b16 %v395
        %v476 = vunpack.c.l.b16 %v396
        %v477 = vunpack.c.l.b16 %v397
        %v478 = vunpack.c.l.b16 %v398
        %v479 = vpack.c.b16 %v448, %v447
        %v480 = vpack.c.b16 %v450, %v449
        %v481 = vpack.c.b16 %v452, %v451
        %v482 = vpack.c.b16 %v454, %v453
        %v483 = vpack.c.b16 %v456, %v455
        %v484 = vpack.c.b16 %v458, %v457
        %v485 = vpack.c.b16 %v460, %v459
        %v486 = vpack.c.b16 %v462, %v461
        %v487 = vpack.c.b16 %v464, %v463
        %v488 = vpack.c.b16 %v466, %v465
        %v489 = vpack.c.b16 %v468, %v467
        %v490 = vpack.c.b16 %v470, %v469
        %v491 = vpack.c.b16 %v472, %v471
        %v492 = vpack.c.b16 %v474, %v473
        %v493 = vpack.c.b16 %v476, %v475
        %v494 = vpack.c.b16 %v478, %v477
        %v527 = vunpack.c.l.b16 %v399
        %v528 = vunpack.c.h.b16 %v399
        %v529 = vunpack.c.l.b16 %v400
        %v530 = vunpack.c.h.b16 %v400
        %v531 = vunpack.c.l.b16 %v401
        %v532 = vunpack.c.h.b16 %v401
        %v533 = vunpack.c.l.b16 %v402
        %v534 = vunpack.c.h.b16 %v402
        %v535 = vunpack.c.l.b16 %v403
        %v536 = vunpack.c.h.b16 %v403
        %v537 = vunpack.c.l.b16 %v404
        %v538 = vunpack.c.h.b16 %v404
        %v539 = vunpack.c.l.b16 %v405
        %v540 = vunpack.c.h.b16 %v405
        %v541 = vunpack.c.l.b16 %v406
        %v542 = vunpack.c.h.b16 %v406
        %v543 = vunpack.c.l.b16 %v407
        %v544 = vunpack.c.h.b16 %v407
        %v545 = vunpack.c.l.b16 %v408
        %v546 = vunpack.c.h.b16 %v408
        %v547 = vunpack.c.l.b16 %v409
        %v548 = vunpack.c.h.b16 %v409
        %v549 = vunpack.c.l.b16 %v410
        %v550 = vunpack.c.h.b16 %v410
        %v551 = vunpack.c.l.b16 %v411
        %v552 = vunpack.c.h.b16 %v411
        %v553 = vunpack.c.l.b16 %v412
        %v554 = vunpack.c.h.b16 %v412
        %v555 = vunpack.c.l.b16 %v413
        %v556 = vunpack.c.h.b16 %v413
        %v557 = vunpack.c.l.b16 %v414
        %v558 = vunpack.c.h.b16 %v414
        %v559 = vpack.c.b16 %v529, %v527
        %v560 = vpack.c.b16 %v530, %v528
        %v561 = vpack.c.b16 %v533, %v531
        %v562 = vpack.c.b16 %v534, %v532
        %v563 = vpack.c.b16 %v537, %v535
        %v564 = vpack.c.b16 %v538, %v536
        %v565 = vpack.c.b16 %v541, %v539
        %v566 = vpack.c.b16 %v542, %v540
        %v567 = vpack.c.b16 %v545, %v543
        %v568 = vpack.c.b16 %v546, %v544
        %v569 = vpack.c.b16 %v549, %v547
        %v570 = vpack.c.b16 %v550, %v548
        %v571 = vpack.c.b16 %v553, %v551
        %v572 = vpack.c.b16 %v554, %v552
        %v573 = vpack.c.b16 %v557, %v555
        %v574 = vpack.c.b16 %v558, %v556
        %591 = vmatprep.subr.bf16.mxu0 %v560
        %592 = vmatpush1.bf16.msra.mxu0 %v559
        %593 = vmatprep.subr.bf16.mxu0 %v562
        %594 = vmatpush1.bf16.msra.mxu0 %v561
        %595 = vmatprep.subr.bf16.mxu0 %v564
        %596 = vmatpush1.bf16.msra.mxu0 %v563
        %597 = vmatprep.subr.bf16.mxu0 %v566
        %598 = vmatpush1.bf16.msra.mxu0 %v565
        %599 = vmatprep.subr.bf16.mxu0 %v568
        %600 = vmatpush1.bf16.msra.mxu0 %v567
        %601 = vmatprep.subr.bf16.mxu0 %v570
        %602 = vmatpush1.bf16.msra.mxu0 %v569
        %603 = vmatprep.subr.bf16.mxu0 %v572
        %604 = vmatpush1.bf16.msra.mxu0 %v571
        %605 = vmatprep.subr.bf16.mxu0 %v574
        %606 = vmatpush1.bf16.msra.mxu0 %v573
        %607 = vmatprep.subr.bf16.mxu0 0
        %608 = vmatpush1.bf16.msra.mxu0 0
        %609 = vmatprep.subr.bf16.mxu0 0
        %610 = vmatpush1.bf16.msra.mxu0 0
        %611 = vmatprep.subr.bf16.mxu0 0
        %612 = vmatpush1.bf16.msra.mxu0 0
        %613 = vmatprep.subr.bf16.mxu0 0
        %614 = vmatpush1.bf16.msra.mxu0 0
        %615 = vmatprep.subr.bf16.mxu0 0
        %616 = vmatpush1.bf16.msra.mxu0 0
        %617 = vmatprep.subr.bf16.mxu0 0
        %618 = vmatpush1.bf16.msra.mxu0 0
        %619 = vmatprep.subr.bf16.mxu0 0
        %620 = vmatpush1.bf16.msra.mxu0 0
        %621 = vmatprep.subr.bf16.mxu0 0
        %622 = vmatpush1.bf16.msra.mxu0 0
        %623 = vmatprep.mubr.bf16.mxu0 0
        %624 = vmatmul.mubr.bf16.gmra.mrb[0].mxu0 %v479
        %v625 = vpop.f32.mrb[0].mxu0
        %v626 = vadd.f32 0.0, %v625
        %v627 = vpop.f32.mrb[0].mxu0
        %v628 = vadd.f32 0.0, %v627
        %v629 = vpop.f32.mrb[0].mxu0
        %v630 = vadd.f32 0.0, %v629
        %v631 = vpop.f32.mrb[0].mxu0
        %v632 = vadd.f32 0.0, %v631
        %633 = vmatprep.mubr.bf16.mxu0 0
        %634 = vmatmul.mubr.bf16.gmra.mrb[0].mxu0 %v480
        %v635 = vpop.f32.mrb[0].mxu0
        %v636 = vadd.f32 0.0, %v635
        %v637 = vpop.f32.mrb[0].mxu0
        %v638 = vadd.f32 0.0, %v637
        %v639 = vpop.f32.mrb[0].mxu0
        %v640 = vadd.f32 0.0, %v639
        %v641 = vpop.f32.mrb[0].mxu0
        %v642 = vadd.f32 0.0, %v641
        %643 = vmatprep.mubr.bf16.mxu0 0
        %644 = vmatmul.mubr.bf16.gmra.mrb[0].mxu0 %v481
        %v645 = vpop.f32.mrb[0].mxu0
        %v646 = vadd.f32 0.0, %v645
        %v647 = vpop.f32.mrb[0].mxu0
        %v648 = vadd.f32 0.0, %v647
        %v649 = vpop.f32.mrb[0].mxu0
        %v650 = vadd.f32 0.0, %v649
        %v651 = vpop.f32.mrb[0].mxu0
        %v652 = vadd.f32 0.0, %v651
        %653 = vmatprep.mubr.bf16.mxu0 0
        %654 = vmatmul.mubr.bf16.gmra.mrb[0].mxu0 %v482
        %v655 = vpop.f32.mrb[0].mxu0
        %v656 = vadd.f32 0.0, %v655
        %v657 = vpop.f32.mrb[0].mxu0
        %v658 = vadd.f32 0.0, %v657
        %v659 = vpop.f32.mrb[0].mxu0
        %v660 = vadd.f32 0.0, %v659
        %v661 = vpop.f32.mrb[0].mxu0
        %v662 = vadd.f32 0.0, %v661
        %663 = vmatprep.mubr.bf16.mxu0 0
        %664 = vmatmul.mubr.bf16.gmra.mrb[0].mxu0 %v483
        %v665 = vpop.f32.mrb[0].mxu0
        %v666 = vadd.f32 0.0, %v665
        %v667 = vpop.f32.mrb[0].mxu0
        %v668 = vadd.f32 0.0, %v667
        %v669 = vpop.f32.mrb[0].mxu0
        %v670 = vadd.f32 0.0, %v669
        %v671 = vpop.f32.mrb[0].mxu0
        %v672 = vadd.f32 0.0, %v671
        %673 = vmatprep.mubr.bf16.mxu0 0
        %674 = vmatmul.mubr.bf16.gmra.mrb[0].mxu0 %v484
        %v675 = vpop.f32.mrb[0].mxu0
        %v676 = vadd.f32 0.0, %v675
        %v677 = vpop.f32.mrb[0].mxu0
        %v678 = vadd.f32 0.0, %v677
        %v679 = vpop.f32.mrb[0].mxu0
        %v680 = vadd.f32 0.0, %v679
        %v681 = vpop.f32.mrb[0].mxu0
        %v682 = vadd.f32 0.0, %v681
        %683 = vmatprep.mubr.bf16.mxu0 0
        %684 = vmatmul.mubr.bf16.gmra.mrb[0].mxu0 %v485
        %v685 = vpop.f32.mrb[0].mxu0
        %v686 = vadd.f32 0.0, %v685
        %v687 = vpop.f32.mrb[0].mxu0
        %v688 = vadd.f32 0.0, %v687
        %v689 = vpop.f32.mrb[0].mxu0
        %v690 = vadd.f32 0.0, %v689
        %v691 = vpop.f32.mrb[0].mxu0
        %v692 = vadd.f32 0.0, %v691
        %693 = vmatprep.mubr.bf16.mxu0 0
        %694 = vmatmul.mubr.bf16.gmra.mrb[0].mxu0 %v486
        %v695 = vpop.f32.mrb[0].mxu0
        %v696 = vadd.f32 0.0, %v695
        %v697 = vpop.f32.mrb[0].mxu0
        %v698 = vadd.f32 0.0, %v697
        %v699 = vpop.f32.mrb[0].mxu0
        %v700 = vadd.f32 0.0, %v699
        %v701 = vpop.f32.mrb[0].mxu0
        %v702 = vadd.f32 0.0, %v701
        %703 = vmatprep.mubr.bf16.mxu0 0
        %704 = vmatmul.mubr.bf16.gmra.mrb[0].mxu0 %v487
        %v705 = vpop.f32.mrb[0].mxu0
        %v706 = vadd.f32 0.0, %v705
        %v707 = vpop.f32.mrb[0].mxu0
        %v708 = vadd.f32 0.0, %v707
        %v709 = vpop.f32.mrb[0].mxu0
        %v710 = vadd.f32 0.0, %v709
        %v711 = vpop.f32.mrb[0].mxu0
        %v712 = vadd.f32 0.0, %v711
        %713 = vmatprep.mubr.bf16.mxu0 0
        %714 = vmatmul.mubr.bf16.gmra.mrb[0].mxu0 %v488
        %v715 = vpop.f32.mrb[0].mxu0
        %v716 = vadd.f32 0.0, %v715
        %v717 = vpop.f32.mrb[0].mxu0
        %v718 = vadd.f32 0.0, %v717
        %v719 = vpop.f32.mrb[0].mxu0
        %v720 = vadd.f32 0.0, %v719
        %v721 = vpop.f32.mrb[0].mxu0
        %v722 = vadd.f32 0.0, %v721
        %723 = vmatprep.mubr.bf16.mxu0 0
        %724 = vmatmul.mubr.bf16.gmra.mrb[0].mxu0 %v489
        %v725 = vpop.f32.mrb[0].mxu0
        %v726 = vadd.f32 0.0, %v725
        %v727 = vpop.f32.mrb[0].mxu0
        %v728 = vadd.f32 0.0, %v727
        %v729 = vpop.f32.mrb[0].mxu0
        %v730 = vadd.f32 0.0, %v729
        %v731 = vpop.f32.mrb[0].mxu0
        %v732 = vadd.f32 0.0, %v731
        %733 = vmatprep.mubr.bf16.mxu0 0
        %734 = vmatmul.mubr.bf16.gmra.mrb[0].mxu0 %v490
        %v735 = vpop.f32.mrb[0].mxu0
        %v736 = vadd.f32 0.0, %v735
        %v737 = vpop.f32.mrb[0].mxu0
        %v738 = vadd.f32 0.0, %v737
        %v739 = vpop.f32.mrb[0].mxu0
        %v740 = vadd.f32 0.0, %v739
        %v741 = vpop.f32.mrb[0].mxu0
        %v742 = vadd.f32 0.0, %v741
        %743 = vmatprep.mubr.bf16.mxu0 0
        %744 = vmatmul.mubr.bf16.gmra.mrb[0].mxu0 %v491
        %v745 = vpop.f32.mrb[0].mxu0
        %v746 = vadd.f32 0.0, %v745
        %v747 = vpop.f32.mrb[0].mxu0
        %v748 = vadd.f32 0.0, %v747
        %v749 = vpop.f32.mrb[0].mxu0
        %v750 = vadd.f32 0.0, %v749
        %v751 = vpop.f32.mrb[0].mxu0
        %v752 = vadd.f32 0.0, %v751
        %753 = vmatprep.mubr.bf16.mxu0 0
        %754 = vmatmul.mubr.bf16.gmra.mrb[0].mxu0 %v492
        %v755 = vpop.f32.mrb[0].mxu0
        %v756 = vadd.f32 0.0, %v755
        %v757 = vpop.f32.mrb[0].mxu0
        %v758 = vadd.f32 0.0, %v757
        %v759 = vpop.f32.mrb[0].mxu0
        %v760 = vadd.f32 0.0, %v759
        %v761 = vpop.f32.mrb[0].mxu0
        %v762 = vadd.f32 0.0, %v761
        %763 = vmatprep.mubr.bf16.mxu0 0
        %764 = vmatmul.mubr.bf16.gmra.mrb[0].mxu0 %v493
        %v765 = vpop.f32.mrb[0].mxu0
        %v766 = vadd.f32 0.0, %v765
        %v767 = vpop.f32.mrb[0].mxu0
        %v768 = vadd.f32 0.0, %v767
        %v769 = vpop.f32.mrb[0].mxu0
        %v770 = vadd.f32 0.0, %v769
        %v771 = vpop.f32.mrb[0].mxu0
        %v772 = vadd.f32 0.0, %v771
        %773 = vmatprep.mubr.bf16.mxu0 0
        %774 = vmatmul.mubr.bf16.gmra.mrb[0].mxu0 %v494
        %v775 = vpop.f32.mrb[0].mxu0
        %v776 = vadd.f32 0.0, %v775
        %v777 = vpop.f32.mrb[0].mxu0
        %v778 = vadd.f32 0.0, %v777
        %v779 = vpop.f32.mrb[0].mxu0
        %v780 = vadd.f32 0.0, %v779
        %v781 = vpop.f32.mrb[0].mxu0
        %v782 = vadd.f32 0.0, %v781
        %783 = vdwg.mxu0
        %v784 = vld [vmem:[%s355] sm:$0x3]
        %v786 = vlaneseq
        %v787 = vshrl.u32 %v786, 7
        %v788 = vsub.s32 0, %v787
        %v789 = vrot.slane %v784, %v788
        %v790 = vlaneseq
        %v791 = vshrl.u32 %v790, 7
        %v792 = vsub.s32 1, %v791
        %v793 = vrot.slane %v784, %v792
        %v796 = vmul.f32 %v626, %v789
        %v797 = vmul.f32 %v628, %v793
        %v798 = vmul.f32 %v630, %v789
        %v799 = vmul.f32 %v632, %v793
        %v800 = vmul.f32 %v636, %v789
        %v801 = vmul.f32 %v638, %v793
        %v802 = vmul.f32 %v640, %v789
        %v803 = vmul.f32 %v642, %v793
        %v804 = vmul.f32 %v646, %v789
        %v805 = vmul.f32 %v648, %v793
        %v806 = vmul.f32 %v650, %v789
        %v807 = vmul.f32 %v652, %v793
        %v808 = vmul.f32 %v656, %v789
        %v809 = vmul.f32 %v658, %v793
        %v810 = vmul.f32 %v660, %v789
        %v811 = vmul.f32 %v662, %v793
        %v812 = vmul.f32 %v666, %v789
        %v813 = vmul.f32 %v668, %v793
        %v814 = vmul.f32 %v670, %v789
        %v815 = vmul.f32 %v672, %v793
        %v816 = vmul.f32 %v676, %v789
        %v817 = vmul.f32 %v678, %v793
        %v818 = vmul.f32 %v680, %v789
        %v819 = vmul.f32 %v682, %v793
        %v820 = vmul.f32 %v686, %v789
        %v821 = vmul.f32 %v688, %v793
        %v822 = vmul.f32 %v690, %v789
        %v823 = vmul.f32 %v692, %v793
        %v824 = vmul.f32 %v696, %v789
        %v825 = vmul.f32 %v698, %v793
        %v826 = vmul.f32 %v700, %v789
        %v827 = vmul.f32 %v702, %v793
        %v828 = vmul.f32 %v706, %v789
        %v829 = vmul.f32 %v708, %v793
        %v830 = vmul.f32 %v710, %v789
        %v831 = vmul.f32 %v712, %v793
        %v832 = vmul.f32 %v716, %v789
        %v833 = vmul.f32 %v718, %v793
        %v834 = vmul.f32 %v720, %v789
        %v835 = vmul.f32 %v722, %v793
        %v836 = vmul.f32 %v726, %v789
        %v837 = vmul.f32 %v728, %v793
        %v838 = vmul.f32 %v730, %v789
        %v839 = vmul.f32 %v732, %v793
        %v840 = vmul.f32 %v736, %v789
        %v841 = vmul.f32 %v738, %v793
        %v842 = vmul.f32 %v740, %v789
        %v843 = vmul.f32 %v742, %v793
        %v844 = vmul.f32 %v746, %v789
        %v845 = vmul.f32 %v748, %v793
        %v846 = vmul.f32 %v750, %v789
        %v847 = vmul.f32 %v752, %v793
        %v848 = vmul.f32 %v756, %v789
        %v849 = vmul.f32 %v758, %v793
        %v850 = vmul.f32 %v760, %v789
        %v851 = vmul.f32 %v762, %v793
        %v852 = vmul.f32 %v766, %v789
        %v853 = vmul.f32 %v768, %v793
        %v854 = vmul.f32 %v770, %v789
        %v855 = vmul.f32 %v772, %v793
        %v856 = vmul.f32 %v776, %v789
        %v857 = vmul.f32 %v778, %v793
        %v858 = vmul.f32 %v780, %v789
        %v859 = vmul.f32 %v782, %v793
        %v860 = vld [vmem:[%s360] sm:$0x3]
        %v862 = vlaneseq
        %v863 = vshrl.u32 %v862, 7
        %v864 = vsub.s32 0, %v863
        %v865 = vrot.slane %v860, %v864
        %v866 = vlaneseq
        %v867 = vshrl.u32 %v866, 7
        %v868 = vsub.s32 1, %v867
        %v869 = vrot.slane %v860, %v868
        %v872 = vadd.f32 %v796, %v865
        %v873 = vadd.f32 %v797, %v869
        %v874 = vadd.f32 %v798, %v865
        %v875 = vadd.f32 %v799, %v869
        %v876 = vadd.f32 %v800, %v865
        %v877 = vadd.f32 %v801, %v869
        %v878 = vadd.f32 %v802, %v865
        %v879 = vadd.f32 %v803, %v869
        %v880 = vadd.f32 %v804, %v865
        %v881 = vadd.f32 %v805, %v869
        %v882 = vadd.f32 %v806, %v865
        %v883 = vadd.f32 %v807, %v869
        %v884 = vadd.f32 %v808, %v865
        %v885 = vadd.f32 %v809, %v869
        %v886 = vadd.f32 %v810, %v865
        %v887 = vadd.f32 %v811, %v869
        %v888 = vadd.f32 %v812, %v865
        %v889 = vadd.f32 %v813, %v869
        %v890 = vadd.f32 %v814, %v865
        %v891 = vadd.f32 %v815, %v869
        %v892 = vadd.f32 %v816, %v865
        %v893 = vadd.f32 %v817, %v869
        %v894 = vadd.f32 %v818, %v865
        %v895 = vadd.f32 %v819, %v869
        %v896 = vadd.f32 %v820, %v865
        %v897 = vadd.f32 %v821, %v869
        %v898 = vadd.f32 %v822, %v865
        %v899 = vadd.f32 %v823, %v869
        %v900 = vadd.f32 %v824, %v865
        %v901 = vadd.f32 %v825, %v869
        %v902 = vadd.f32 %v826, %v865
        %v903 = vadd.f32 %v827, %v869
        %v904 = vadd.f32 %v828, %v865
        %v905 = vadd.f32 %v829, %v869
        %v906 = vadd.f32 %v830, %v865
        %v907 = vadd.f32 %v831, %v869
        %v908 = vadd.f32 %v832, %v865
        %v909 = vadd.f32 %v833, %v869
        %v910 = vadd.f32 %v834, %v865
        %v911 = vadd.f32 %v835, %v869
        %v912 = vadd.f32 %v836, %v865
        %v913 = vadd.f32 %v837, %v869
        %v914 = vadd.f32 %v838, %v865
        %v915 = vadd.f32 %v839, %v869
        %v916 = vadd.f32 %v840, %v865
        %v917 = vadd.f32 %v841, %v869
        %v918 = vadd.f32 %v842, %v865
        %v919 = vadd.f32 %v843, %v869
        %v920 = vadd.f32 %v844, %v865
        %v921 = vadd.f32 %v845, %v869
        %v922 = vadd.f32 %v846, %v865
        %v923 = vadd.f32 %v847, %v869
        %v924 = vadd.f32 %v848, %v865
        %v925 = vadd.f32 %v849, %v869
        %v926 = vadd.f32 %v850, %v865
        %v927 = vadd.f32 %v851, %v869
        %v928 = vadd.f32 %v852, %v865
        %v929 = vadd.f32 %v853, %v869
        %v930 = vadd.f32 %v854, %v865
        %v931 = vadd.f32 %v855, %v869
        %v932 = vadd.f32 %v856, %v865
        %v933 = vadd.f32 %v857, %v869
        %v934 = vadd.f32 %v858, %v865
        %v935 = vadd.f32 %v859, %v869
        %v936 = vld [vmem:[%s310] sm:$0xff]
        %v937 = vld [vmem:[%s310 + $0x8] sm:$0xff]
        %v938 = vld [vmem:[%s310 + $0x10] sm:$0xff]
        %v939 = vld [vmem:[%s310 + $0x18] sm:$0xff]
        %v940 = vld [vmem:[%s310 + $0x20] sm:$0xff]
        %v941 = vld [vmem:[%s310 + $0x28] sm:$0xff]
        %v942 = vld [vmem:[%s310 + $0x30] sm:$0xff]
        %v943 = vld [vmem:[%s310 + $0x38] sm:$0xff]
        %v944 = vld [vmem:[%s310 + $0x40] sm:$0xff]
        %v945 = vld [vmem:[%s310 + $0x48] sm:$0xff]
        %v946 = vld [vmem:[%s310 + $0x50] sm:$0xff]
        %v947 = vld [vmem:[%s310 + $0x58] sm:$0xff]
        %v948 = vld [vmem:[%s310 + $0x60] sm:$0xff]
        %v949 = vld [vmem:[%s310 + $0x68] sm:$0xff]
        %v950 = vld [vmem:[%s310 + $0x70] sm:$0xff]
        %v951 = vld [vmem:[%s310 + $0x78] sm:$0xff]
        %v952 = vld [vmem:[%s310 + $0x80] sm:$0xff]
        %v953 = vld [vmem:[%s310 + $0x88] sm:$0xff]
        %v954 = vld [vmem:[%s310 + $0x90] sm:$0xff]
        %v955 = vld [vmem:[%s310 + $0x98] sm:$0xff]
        %v956 = vld [vmem:[%s310 + $0xa0] sm:$0xff]
        %v957 = vld [vmem:[%s310 + $0xa8] sm:$0xff]
        %v958 = vld [vmem:[%s310 + $0xb0] sm:$0xff]
        %v959 = vld [vmem:[%s310 + $0xb8] sm:$0xff]
        %v960 = vld [vmem:[%s310 + $0xc0] sm:$0xff]
        %v961 = vld [vmem:[%s310 + $0xc8] sm:$0xff]
        %v962 = vld [vmem:[%s310 + $0xd0] sm:$0xff]
        %v963 = vld [vmem:[%s310 + $0xd8] sm:$0xff]
        %v964 = vld [vmem:[%s310 + $0xe0] sm:$0xff]
        %v965 = vld [vmem:[%s310 + $0xe8] sm:$0xff]
        %v966 = vld [vmem:[%s310 + $0xf0] sm:$0xff]
        %v967 = vld [vmem:[%s310 + $0xf8] sm:$0xff]
        %v968 = vunpack.c.l.bf16 %v936
        %v969 = vunpack.c.h.bf16 %v936
        %v970 = vunpack.c.l.bf16 %v937
        %v971 = vunpack.c.h.bf16 %v937
        %v972 = vunpack.c.l.bf16 %v938
        %v973 = vunpack.c.h.bf16 %v938
        %v974 = vunpack.c.l.bf16 %v939
        %v975 = vunpack.c.h.bf16 %v939
        %v976 = vunpack.c.l.bf16 %v940
        %v977 = vunpack.c.h.bf16 %v940
        %v978 = vunpack.c.l.bf16 %v941
        %v979 = vunpack.c.h.bf16 %v941
        %v980 = vunpack.c.l.bf16 %v942
        %v981 = vunpack.c.h.bf16 %v942
        %v982 = vunpack.c.l.bf16 %v943
        %v983 = vunpack.c.h.bf16 %v943
        %v984 = vunpack.c.l.bf16 %v944
        %v985 = vunpack.c.h.bf16 %v944
        %v986 = vunpack.c.l.bf16 %v945
        %v987 = vunpack.c.h.bf16 %v945
        %v988 = vunpack.c.l.bf16 %v946
        %v989 = vunpack.c.h.bf16 %v946
        %v990 = vunpack.c.l.bf16 %v947
        %v991 = vunpack.c.h.bf16 %v947
        %v992 = vunpack.c.l.bf16 %v948
        %v993 = vunpack.c.h.bf16 %v948
        %v994 = vunpack.c.l.bf16 %v949
        %v995 = vunpack.c.h.bf16 %v949
        %v996 = vunpack.c.l.bf16 %v950
        %v997 = vunpack.c.h.bf16 %v950
        %v998 = vunpack.c.l.bf16 %v951
        %v999 = vunpack.c.h.bf16 %v951
        %v1000 = vunpack.c.l.bf16 %v952
        %v1001 = vunpack.c.h.bf16 %v952
        %v1002 = vunpack.c.l.bf16 %v953
        %v1003 = vunpack.c.h.bf16 %v953
        %v1004 = vunpack.c.l.bf16 %v954
        %v1005 = vunpack.c.h.bf16 %v954
        %v1006 = vunpack.c.l.bf16 %v955
        %v1007 = vunpack.c.h.bf16 %v955
        %v1008 = vunpack.c.l.bf16 %v956
        %v1009 = vunpack.c.h.bf16 %v956
        %v1010 = vunpack.c.l.bf16 %v957
        %v1011 = vunpack.c.h.bf16 %v957
        %v1012 = vunpack.c.l.bf16 %v958
        %v1013 = vunpack.c.h.bf16 %v958
        %v1014 = vunpack.c.l.bf16 %v959
        %v1015 = vunpack.c.h.bf16 %v959
        %v1016 = vunpack.c.l.bf16 %v960
        %v1017 = vunpack.c.h.bf16 %v960
        %v1018 = vunpack.c.l.bf16 %v961
        %v1019 = vunpack.c.h.bf16 %v961
        %v1020 = vunpack.c.l.bf16 %v962
        %v1021 = vunpack.c.h.bf16 %v962
        %v1022 = vunpack.c.l.bf16 %v963
        %v1023 = vunpack.c.h.bf16 %v963
        %v1024 = vunpack.c.l.bf16 %v964
        %v1025 = vunpack.c.h.bf16 %v964
        %v1026 = vunpack.c.l.bf16 %v965
        %v1027 = vunpack.c.h.bf16 %v965
        %v1028 = vunpack.c.l.bf16 %v966
        %v1029 = vunpack.c.h.bf16 %v966
        %v1030 = vunpack.c.l.bf16 %v967
        %v1031 = vunpack.c.h.bf16 %v967
        %v1032 = vadd.f32 %v872, %v968
        %v1033 = vadd.f32 %v873, %v969
        %v1034 = vadd.f32 %v874, %v970
        %v1035 = vadd.f32 %v875, %v971
        %v1036 = vadd.f32 %v876, %v972
        %v1037 = vadd.f32 %v877, %v973
        %v1038 = vadd.f32 %v878, %v974
        %v1039 = vadd.f32 %v879, %v975
        %v1040 = vadd.f32 %v880, %v976
        %v1041 = vadd.f32 %v881, %v977
        %v1042 = vadd.f32 %v882, %v978
        %v1043 = vadd.f32 %v883, %v979
        %v1044 = vadd.f32 %v884, %v980
        %v1045 = vadd.f32 %v885, %v981
        %v1046 = vadd.f32 %v886, %v982
        %v1047 = vadd.f32 %v887, %v983
        %v1048 = vadd.f32 %v888, %v984
        %v1049 = vadd.f32 %v889, %v985
        %v1050 = vadd.f32 %v890, %v986
        %v1051 = vadd.f32 %v891, %v987
        %v1052 = vadd.f32 %v892, %v988
        %v1053 = vadd.f32 %v893, %v989
        %v1054 = vadd.f32 %v894, %v990
        %v1055 = vadd.f32 %v895, %v991
        %v1056 = vadd.f32 %v896, %v992
        %v1057 = vadd.f32 %v897, %v993
        %v1058 = vadd.f32 %v898, %v994
        %v1059 = vadd.f32 %v899, %v995
        %v1060 = vadd.f32 %v900, %v996
        %v1061 = vadd.f32 %v901, %v997
        %v1062 = vadd.f32 %v902, %v998
        %v1063 = vadd.f32 %v903, %v999
        %v1064 = vadd.f32 %v904, %v1000
        %v1065 = vadd.f32 %v905, %v1001
        %v1066 = vadd.f32 %v906, %v1002
        %v1067 = vadd.f32 %v907, %v1003
        %v1068 = vadd.f32 %v908, %v1004
        %v1069 = vadd.f32 %v909, %v1005
        %v1070 = vadd.f32 %v910, %v1006
        %v1071 = vadd.f32 %v911, %v1007
        %v1072 = vadd.f32 %v912, %v1008
        %v1073 = vadd.f32 %v913, %v1009
        %v1074 = vadd.f32 %v914, %v1010
        %v1075 = vadd.f32 %v915, %v1011
        %v1076 = vadd.f32 %v916, %v1012
        %v1077 = vadd.f32 %v917, %v1013
        %v1078 = vadd.f32 %v918, %v1014
        %v1079 = vadd.f32 %v919, %v1015
        %v1080 = vadd.f32 %v920, %v1016
        %v1081 = vadd.f32 %v921, %v1017
        %v1082 = vadd.f32 %v922, %v1018
        %v1083 = vadd.f32 %v923, %v1019
        %v1084 = vadd.f32 %v924, %v1020
        %v1085 = vadd.f32 %v925, %v1021
        %v1086 = vadd.f32 %v926, %v1022
        %v1087 = vadd.f32 %v927, %v1023
        %v1088 = vadd.f32 %v928, %v1024
        %v1089 = vadd.f32 %v929, %v1025
        %v1090 = vadd.f32 %v930, %v1026
        %v1091 = vadd.f32 %v931, %v1027
        %v1092 = vadd.f32 %v932, %v1028
        %v1093 = vadd.f32 %v933, %v1029
        %v1094 = vadd.f32 %v934, %v1030
        %v1095 = vadd.f32 %v935, %v1031
        %v1096 = vmax.f32 %v1032, 0.0
        %v1097 = vmax.f32 %v1033, 0.0
        %v1098 = vmax.f32 %v1034, 0.0
        %v1099 = vmax.f32 %v1035, 0.0
        %v1100 = vmax.f32 %v1036, 0.0
        %v1101 = vmax.f32 %v1037, 0.0
        %v1102 = vmax.f32 %v1038, 0.0
        %v1103 = vmax.f32 %v1039, 0.0
        %v1104 = vmax.f32 %v1040, 0.0
        %v1105 = vmax.f32 %v1041, 0.0
        %v1106 = vmax.f32 %v1042, 0.0
        %v1107 = vmax.f32 %v1043, 0.0
        %v1108 = vmax.f32 %v1044, 0.0
        %v1109 = vmax.f32 %v1045, 0.0
        %v1110 = vmax.f32 %v1046, 0.0
        %v1111 = vmax.f32 %v1047, 0.0
        %v1112 = vmax.f32 %v1048, 0.0
        %v1113 = vmax.f32 %v1049, 0.0
        %v1114 = vmax.f32 %v1050, 0.0
        %v1115 = vmax.f32 %v1051, 0.0
        %v1116 = vmax.f32 %v1052, 0.0
        %v1117 = vmax.f32 %v1053, 0.0
        %v1118 = vmax.f32 %v1054, 0.0
        %v1119 = vmax.f32 %v1055, 0.0
        %v1120 = vmax.f32 %v1056, 0.0
        %v1121 = vmax.f32 %v1057, 0.0
        %v1122 = vmax.f32 %v1058, 0.0
        %v1123 = vmax.f32 %v1059, 0.0
        %v1124 = vmax.f32 %v1060, 0.0
        %v1125 = vmax.f32 %v1061, 0.0
        %v1126 = vmax.f32 %v1062, 0.0
        %v1127 = vmax.f32 %v1063, 0.0
        %v1128 = vmax.f32 %v1064, 0.0
        %v1129 = vmax.f32 %v1065, 0.0
        %v1130 = vmax.f32 %v1066, 0.0
        %v1131 = vmax.f32 %v1067, 0.0
        %v1132 = vmax.f32 %v1068, 0.0
        %v1133 = vmax.f32 %v1069, 0.0
        %v1134 = vmax.f32 %v1070, 0.0
        %v1135 = vmax.f32 %v1071, 0.0
        %v1136 = vmax.f32 %v1072, 0.0
        %v1137 = vmax.f32 %v1073, 0.0
        %v1138 = vmax.f32 %v1074, 0.0
        %v1139 = vmax.f32 %v1075, 0.0
        %v1140 = vmax.f32 %v1076, 0.0
        %v1141 = vmax.f32 %v1077, 0.0
        %v1142 = vmax.f32 %v1078, 0.0
        %v1143 = vmax.f32 %v1079, 0.0
        %v1144 = vmax.f32 %v1080, 0.0
        %v1145 = vmax.f32 %v1081, 0.0
        %v1146 = vmax.f32 %v1082, 0.0
        %v1147 = vmax.f32 %v1083, 0.0
        %v1148 = vmax.f32 %v1084, 0.0
        %v1149 = vmax.f32 %v1085, 0.0
        %v1150 = vmax.f32 %v1086, 0.0
        %v1151 = vmax.f32 %v1087, 0.0
        %v1152 = vmax.f32 %v1088, 0.0
        %v1153 = vmax.f32 %v1089, 0.0
        %v1154 = vmax.f32 %v1090, 0.0
        %v1155 = vmax.f32 %v1091, 0.0
        %v1156 = vmax.f32 %v1092, 0.0
        %v1157 = vmax.f32 %v1093, 0.0
        %v1158 = vmax.f32 %v1094, 0.0
        %v1159 = vmax.f32 %v1095, 0.0
        %v1160 = vmin.f32 %v1096, 6.0
        %v1161 = vmin.f32 %v1097, 6.0
        %v1162 = vmin.f32 %v1098, 6.0
        %v1163 = vmin.f32 %v1099, 6.0
        %v1164 = vmin.f32 %v1100, 6.0
        %v1165 = vmin.f32 %v1101, 6.0
        %v1166 = vmin.f32 %v1102, 6.0
        %v1167 = vmin.f32 %v1103, 6.0
        %v1168 = vmin.f32 %v1104, 6.0
        %v1169 = vmin.f32 %v1105, 6.0
        %v1170 = vmin.f32 %v1106, 6.0
        %v1171 = vmin.f32 %v1107, 6.0
        %v1172 = vmin.f32 %v1108, 6.0
        %v1173 = vmin.f32 %v1109, 6.0
        %v1174 = vmin.f32 %v1110, 6.0
        %v1175 = vmin.f32 %v1111, 6.0
        %v1176 = vmin.f32 %v1112, 6.0
        %v1177 = vmin.f32 %v1113, 6.0
        %v1178 = vmin.f32 %v1114, 6.0
        %v1179 = vmin.f32 %v1115, 6.0
        %v1180 = vmin.f32 %v1116, 6.0
        %v1181 = vmin.f32 %v1117, 6.0
        %v1182 = vmin.f32 %v1118, 6.0
        %v1183 = vmin.f32 %v1119, 6.0
        %v1184 = vmin.f32 %v1120, 6.0
        %v1185 = vmin.f32 %v1121, 6.0
        %v1186 = vmin.f32 %v1122, 6.0
        %v1187 = vmin.f32 %v1123, 6.0
        %v1188 = vmin.f32 %v1124, 6.0
        %v1189 = vmin.f32 %v1125, 6.0
        %v1190 = vmin.f32 %v1126, 6.0
        %v1191 = vmin.f32 %v1127, 6.0
        %v1192 = vmin.f32 %v1128, 6.0
        %v1193 = vmin.f32 %v1129, 6.0
        %v1194 = vmin.f32 %v1130, 6.0
        %v1195 = vmin.f32 %v1131, 6.0
        %v1196 = vmin.f32 %v1132, 6.0
        %v1197 = vmin.f32 %v1133, 6.0
        %v1198 = vmin.f32 %v1134, 6.0
        %v1199 = vmin.f32 %v1135, 6.0
        %v1200 = vmin.f32 %v1136, 6.0
        %v1201 = vmin.f32 %v1137, 6.0
        %v1202 = vmin.f32 %v1138, 6.0
        %v1203 = vmin.f32 %v1139, 6.0
        %v1204 = vmin.f32 %v1140, 6.0
        %v1205 = vmin.f32 %v1141, 6.0
        %v1206 = vmin.f32 %v1142, 6.0
        %v1207 = vmin.f32 %v1143, 6.0
        %v1208 = vmin.f32 %v1144, 6.0
        %v1209 = vmin.f32 %v1145, 6.0
        %v1210 = vmin.f32 %v1146, 6.0
        %v1211 = vmin.f32 %v1147, 6.0
        %v1212 = vmin.f32 %v1148, 6.0
        %v1213 = vmin.f32 %v1149, 6.0
        %v1214 = vmin.f32 %v1150, 6.0
        %v1215 = vmin.f32 %v1151, 6.0
        %v1216 = vmin.f32 %v1152, 6.0
        %v1217 = vmin.f32 %v1153, 6.0
        %v1218 = vmin.f32 %v1154, 6.0
        %v1219 = vmin.f32 %v1155, 6.0
        %v1220 = vmin.f32 %v1156, 6.0
        %v1221 = vmin.f32 %v1157, 6.0
        %v1222 = vmin.f32 %v1158, 6.0
        %v1223 = vmin.f32 %v1159, 6.0
        %v1224 = vpack.c.bf16 %v1162, %v1160
        %v1225 = vpack.c.bf16 %v1163, %v1161
        %v1226 = vpack.c.bf16 %v1166, %v1164
        %v1227 = vpack.c.bf16 %v1167, %v1165
        %v1228 = vpack.c.bf16 %v1170, %v1168
        %v1229 = vpack.c.bf16 %v1171, %v1169
        %v1230 = vpack.c.bf16 %v1174, %v1172
        %v1231 = vpack.c.bf16 %v1175, %v1173
        %v1232 = vpack.c.bf16 %v1178, %v1176
        %v1233 = vpack.c.bf16 %v1179, %v1177
        %v1234 = vpack.c.bf16 %v1182, %v1180
        %v1235 = vpack.c.bf16 %v1183, %v1181
        %v1236 = vpack.c.bf16 %v1186, %v1184
        %v1237 = vpack.c.bf16 %v1187, %v1185
        %v1238 = vpack.c.bf16 %v1190, %v1188
        %v1239 = vpack.c.bf16 %v1191, %v1189
        %v1240 = vpack.c.bf16 %v1194, %v1192
        %v1241 = vpack.c.bf16 %v1195, %v1193
        %v1242 = vpack.c.bf16 %v1198, %v1196
        %v1243 = vpack.c.bf16 %v1199, %v1197
        %v1244 = vpack.c.bf16 %v1202, %v1200
        %v1245 = vpack.c.bf16 %v1203, %v1201
        %v1246 = vpack.c.bf16 %v1206, %v1204
        %v1247 = vpack.c.bf16 %v1207, %v1205
        %v1248 = vpack.c.bf16 %v1210, %v1208
        %v1249 = vpack.c.bf16 %v1211, %v1209
        %v1250 = vpack.c.bf16 %v1214, %v1212
        %v1251 = vpack.c.bf16 %v1215, %v1213
        %v1252 = vpack.c.bf16 %v1218, %v1216
        %v1253 = vpack.c.bf16 %v1219, %v1217
        %v1254 = vpack.c.bf16 %v1222, %v1220
        %v1255 = vpack.c.bf16 %v1223, %v1221
        %v1288 = vunpack.c.l.b16 %v1224
        %v1289 = vunpack.c.l.b16 %v1225
        %v1290 = vunpack.c.h.b16 %v1224
        %v1291 = vunpack.c.h.b16 %v1225
        %v1292 = vunpack.c.l.b16 %v1226
        %v1293 = vunpack.c.l.b16 %v1227
        %v1294 = vunpack.c.h.b16 %v1226
        %v1295 = vunpack.c.h.b16 %v1227
        %v1296 = vunpack.c.l.b16 %v1228
        %v1297 = vunpack.c.l.b16 %v1229
        %v1298 = vunpack.c.h.b16 %v1228
        %v1299 = vunpack.c.h.b16 %v1229
        %v1300 = vunpack.c.l.b16 %v1230
        %v1301 = vunpack.c.l.b16 %v1231
        %v1302 = vunpack.c.h.b16 %v1230
        %v1303 = vunpack.c.h.b16 %v1231
        %v1304 = vunpack.c.l.b16 %v1232
        %v1305 = vunpack.c.l.b16 %v1233
        %v1306 = vunpack.c.h.b16 %v1232
        %v1307 = vunpack.c.h.b16 %v1233
        %v1308 = vunpack.c.l.b16 %v1234
        %v1309 = vunpack.c.l.b16 %v1235
        %v1310 = vunpack.c.h.b16 %v1234
        %v1311 = vunpack.c.h.b16 %v1235
        %v1312 = vunpack.c.l.b16 %v1236
        %v1313 = vunpack.c.l.b16 %v1237
        %v1314 = vunpack.c.h.b16 %v1236
        %v1315 = vunpack.c.h.b16 %v1237
        %v1316 = vunpack.c.l.b16 %v1238
        %v1317 = vunpack.c.l.b16 %v1239
        %v1318 = vunpack.c.h.b16 %v1238
        %v1319 = vunpack.c.h.b16 %v1239
        %v1320 = vunpack.c.l.b16 %v1240
        %v1321 = vunpack.c.l.b16 %v1241
        %v1322 = vunpack.c.h.b16 %v1240
        %v1323 = vunpack.c.h.b16 %v1241
        %v1324 = vunpack.c.l.b16 %v1242
        %v1325 = vunpack.c.l.b16 %v1243
        %v1326 = vunpack.c.h.b16 %v1242
        %v1327 = vunpack.c.h.b16 %v1243
        %v1328 = vunpack.c.l.b16 %v1244
        %v1329 = vunpack.c.l.b16 %v1245
        %v1330 = vunpack.c.h.b16 %v1244
        %v1331 = vunpack.c.h.b16 %v1245
        %v1332 = vunpack.c.l.b16 %v1246
        %v1333 = vunpack.c.l.b16 %v1247
        %v1334 = vunpack.c.h.b16 %v1246
        %v1335 = vunpack.c.h.b16 %v1247
        %v1336 = vunpack.c.l.b16 %v1248
        %v1337 = vunpack.c.l.b16 %v1249
        %v1338 = vunpack.c.h.b16 %v1248
        %v1339 = vunpack.c.h.b16 %v1249
        %v1340 = vunpack.c.l.b16 %v1250
        %v1341 = vunpack.c.l.b16 %v1251
        %v1342 = vunpack.c.h.b16 %v1250
        %v1343 = vunpack.c.h.b16 %v1251
        %v1344 = vunpack.c.l.b16 %v1252
        %v1345 = vunpack.c.l.b16 %v1253
        %v1346 = vunpack.c.h.b16 %v1252
        %v1347 = vunpack.c.h.b16 %v1253
        %v1348 = vunpack.c.l.b16 %v1254
        %v1349 = vunpack.c.l.b16 %v1255
        %v1350 = vunpack.c.h.b16 %v1254
        %v1351 = vunpack.c.h.b16 %v1255
        %v1352 = vpack.c.b16 %v1289, %v1288
        %v1353 = vpack.c.b16 %v1291, %v1290
        %v1354 = vpack.c.b16 %v1293, %v1292
        %v1355 = vpack.c.b16 %v1295, %v1294
        %v1356 = vpack.c.b16 %v1297, %v1296
        %v1357 = vpack.c.b16 %v1299, %v1298
        %v1358 = vpack.c.b16 %v1301, %v1300
        %v1359 = vpack.c.b16 %v1303, %v1302
        %v1360 = vpack.c.b16 %v1305, %v1304
        %v1361 = vpack.c.b16 %v1307, %v1306
        %v1362 = vpack.c.b16 %v1309, %v1308
        %v1363 = vpack.c.b16 %v1311, %v1310
        %v1364 = vpack.c.b16 %v1313, %v1312
        %v1365 = vpack.c.b16 %v1315, %v1314
        %v1366 = vpack.c.b16 %v1317, %v1316
        %v1367 = vpack.c.b16 %v1319, %v1318
        %v1368 = vpack.c.b16 %v1321, %v1320
        %v1369 = vpack.c.b16 %v1323, %v1322
        %v1370 = vpack.c.b16 %v1325, %v1324
        %v1371 = vpack.c.b16 %v1327, %v1326
        %v1372 = vpack.c.b16 %v1329, %v1328
        %v1373 = vpack.c.b16 %v1331, %v1330
        %v1374 = vpack.c.b16 %v1333, %v1332
        %v1375 = vpack.c.b16 %v1335, %v1334
        %v1376 = vpack.c.b16 %v1337, %v1336
        %v1377 = vpack.c.b16 %v1339, %v1338
        %v1378 = vpack.c.b16 %v1341, %v1340
        %v1379 = vpack.c.b16 %v1343, %v1342
        %v1380 = vpack.c.b16 %v1345, %v1344
        %v1381 = vpack.c.b16 %v1347, %v1346
        %v1382 = vpack.c.b16 %v1349, %v1348
        %v1383 = vpack.c.b16 %v1351, %v1350
        %1416 = vst [vmem:[%s349] sm:$0xff] %v1352
        %1417 = vst [vmem:[%s349 + $0x8] sm:$0xff] %v1353
        %1418 = vst [vmem:[%s349 + $0x10] sm:$0xff] %v1354
        %1419 = vst [vmem:[%s349 + $0x18] sm:$0xff] %v1355
        %1420 = vst [vmem:[%s349 + $0x20] sm:$0xff] %v1356
        %1421 = vst [vmem:[%s349 + $0x28] sm:$0xff] %v1357
        %1422 = vst [vmem:[%s349 + $0x30] sm:$0xff] %v1358
        %1423 = vst [vmem:[%s349 + $0x38] sm:$0xff] %v1359
        %1424 = vst [vmem:[%s349 + $0x40] sm:$0xff] %v1360
        %1425 = vst [vmem:[%s349 + $0x48] sm:$0xff] %v1361
        %1426 = vst [vmem:[%s349 + $0x50] sm:$0xff] %v1362
        %1427 = vst [vmem:[%s349 + $0x58] sm:$0xff] %v1363
        %1428 = vst [vmem:[%s349 + $0x60] sm:$0xff] %v1364
        %1429 = vst [vmem:[%s349 + $0x68] sm:$0xff] %v1365
        %1430 = vst [vmem:[%s349 + $0x70] sm:$0xff] %v1366
        %1431 = vst [vmem:[%s349 + $0x78] sm:$0xff] %v1367
        %1432 = vst [vmem:[%s349 + $0x80] sm:$0xff] %v1368
        %1433 = vst [vmem:[%s349 + $0x88] sm:$0xff] %v1369
        %1434 = vst [vmem:[%s349 + $0x90] sm:$0xff] %v1370
        %1435 = vst [vmem:[%s349 + $0x98] sm:$0xff] %v1371
        %1436 = vst [vmem:[%s349 + $0xa0] sm:$0xff] %v1372
        %1437 = vst [vmem:[%s349 + $0xa8] sm:$0xff] %v1373
        %1438 = vst [vmem:[%s349 + $0xb0] sm:$0xff] %v1374
        %1439 = vst [vmem:[%s349 + $0xb8] sm:$0xff] %v1375
        %1440 = vst [vmem:[%s349 + $0xc0] sm:$0xff] %v1376
        %1441 = vst [vmem:[%s349 + $0xc8] sm:$0xff] %v1377
        %1442 = vst [vmem:[%s349 + $0xd0] sm:$0xff] %v1378
        %1443 = vst [vmem:[%s349 + $0xd8] sm:$0xff] %v1379
        %1444 = vst [vmem:[%s349 + $0xe0] sm:$0xff] %v1380
        %1445 = vst [vmem:[%s349 + $0xe8] sm:$0xff] %v1381
        %1446 = vst [vmem:[%s349 + $0xf0] sm:$0xff] %v1382
        %1447 = vst [vmem:[%s349 + $0xf8] sm:$0xff] %v1383
        %s1448 = sand.u32 %s177, 1
        %s1449 = scalar_lea.sflag [#allocation4], %s1448
        %s1450 = sand.u32 %s177, 1
        %s1451 = smul.addr %s1450, 256
        %s1452 = scalar_lea.vmem [#allocation8], %s1451
        // Predicated region
        $region53: #{tpu_custom_call.1} parent=39 // pred_check
          %p1453 = pneg %p187
        $region54: #{tpu_custom_call.1} parent=39 // pred_check_branch
          %1455 = sbr.rel (%p1453) target = $region56
        $region55: #{tpu_custom_call.1} parent=39 // pred_region
          %s1456 = smul.u32 32, %s27
          %s1457 = smul.u32 2, %s28
          %s1459 = ssub.s32 4096, 4096
          %1460 = vsyncadd %s1449, %s1459
          %s1461 = smul.addr %s1456, 4
          %s1462 = sadd.s32 %s1457, %s1461
          %s1463 = smul.addr %s1462, 64
          %s1464 = scalar_lea.hbm %s5, %s1463
          %s1465 = sshll.u32 %s1452, 4
          %s1466 = int_to_ptr.vmem [resolvable:$true] %s1465
          %1471 = dma.vmem_to_hbm [thread:$0]  %s1466, 4096, %s1464, %s1449, 128, 256, 8
        $region56: #{tpu_custom_call.1} parent=39 // pred_fallthru
          _
      $region40: #{tpu_custom_call.1} parent=5 // pred_fallthru
        _
      %p1472 = scmp.le.s32.totalorder 2, %s18
      // Predicated region
      $region57: #{tpu_custom_call.1} parent=5 // pred_check
        %p1473 = pneg %p1472
      $region58: #{tpu_custom_call.1} parent=5 // pred_check_branch
        %1475 = sbr.rel (%p1473) target = $region60
      $region59: #{tpu_custom_call.1} parent=5 // pred_region
        %s1476 = ssub.s32 %s18, 2
        // Predicated region
        $region61: #{tpu_custom_call.1} parent=59 // pred_check
          %p1477 = pneg %p193
        $region62: #{tpu_custom_call.1} parent=59 // pred_check_branch
          %1479 = sbr.rel (%p1477) target = $region64
        $region63: #{tpu_custom_call.1} parent=59 // pred_region
          %s1480 = sand.u32 %s178, 1
          %s1481 = scalar_lea.sflag [#allocation4], %s1480
          %s1482 = sand.u32 %s178, 1
          %s1483 = smul.addr %s1482, 256
          %s1484 = scalar_lea.vmem [#allocation8], %s1483
          %1485 = dma.done %s1481, 4096
        $region64: #{tpu_custom_call.1} parent=59 // pred_fallthru
          _
      $region60: #{tpu_custom_call.1} parent=5 // pred_fallthru
        _
    $region6: #{tpu_custom_call.1} parent=1 // loop_footer
      %s22 = sadd.s32 1, %s18
    $region7: #{tpu_custom_call.1} parent=1 // loop_footer_branch
      %17 = sbr.rel target = $region3
    $region8: #{tpu_custom_call.1} parent=1 // loop_exit
      _
    %1486 = vsyncpa [#allocation3], 1
    %s1487 = scalar_lea.sflag [#allocation3], 1
    %1488 = vsyncpa %s1487, 1
    %1489 = vsyncpa [#allocation6], 1
    %s1490 = scalar_lea.sflag [#allocation6], 1
    %1491 = vsyncpa %s1490, 1
    %1492 = vsyncpa [#allocation4], 1
    %s1493 = scalar_lea.sflag [#allocation4], 1
    %1494 = vsyncpa %s1493, 1

</llo_original>
